<compile_context>
chip_gen: v6e
topology: v6e:2x2x1
jax: 0.10.0
libtpu: 0.0.40
codegen_flags: <defaults>
</compile_context>

<pallas_src>
import functools
import math

import jax
import jax.numpy as jnp
from jax import lax
from jax.experimental import pallas as pl
from jax.experimental.pallas import tpu as pltpu

_LN_EPS = 1e-5
_MASK_BIAS = -1e10


# ------------------------------------------------------------------ small helpers ---
def _layer_norm(x, gamma, beta):
    mu = jnp.mean(x, axis=-1, keepdims=True)
    var = jnp.mean(jnp.square(x - mu), axis=-1, keepdims=True)
    return (x - mu) * lax.rsqrt(var + _LN_EPS) * gamma + beta


def _pick_tile(total, target, align):
    """Largest divisor of `total` <= target that is a multiple of `align`
    (falls back to the full extent, which is always a legal block)."""
    if total <= target:
        return total
    for t in range(target, 0, -1):
        if total % t == 0 and t % align == 0:
            return t
    return total


def _pick_head_group(n_heads, head_dim, target_lanes=256):
    """Heads per grid step: widest group with g*hd <= target_lanes whose lane width is
    a legal BlockSpec lane dim (multiple of 128, or the full hidden dim).
    target_lanes=256 matches the v6e/v7x MXU; on v5e it simply becomes two MXU passes."""
    for g in range(n_heads, 0, -1):
        if n_heads % g:
            continue
        lanes = g * head_dim
        if lanes <= target_lanes and (lanes % 128 == 0 or g == n_heads):
            return g
    return n_heads


# -------------------------------------------------- kernel 1: attention + LN1 -------
def _attn_ln1_kernel(xq_ref, xkv_ref, bias_ref,
                     wq_ref, bq_ref, wk_ref, bk_ref, wv_ref, bv_ref,
                     wo_ref, bo_ref, g1_ref, be1_ref,
                     y_ref,
                     acc_ref, kc_ref, vc_ref,
                     *, n_head_groups, group_size, head_dim):
    qi = pl.program_id(1)
    hg = pl.program_id(2)

    xq = xq_ref[0]                                   # (TQ, H) f32 (residual path)
    xq_b = xq.astype(jnp.bfloat16)
    bias = bias_ref[0, 0]                            # (S,)   f32 additive mask bias

    @pl.when(hg == 0)
    def _zero_acc():
        acc_ref[...] = jnp.zeros_like(acc_ref)

    # K/V projection for this head group: computed at the first query tile of each
    # batch element, cached in bf16 VMEM and reused for the remaining query tiles.
    @pl.when(qi == 0)
    def _project_kv():
        xkv = xkv_ref[0]                             # (S, H) bf16 (pre-cast in wrapper)
        k = jnp.dot(xkv, wk_ref[...], preferred_element_type=jnp.float32) + bk_ref[0]
        v = jnp.dot(xkv, wv_ref[...], preferred_element_type=jnp.float32) + bv_ref[0]
        kc_ref[hg] = k.astype(jnp.bfloat16)
        vc_ref[hg] = v.astype(jnp.bfloat16)

    k_b = kc_ref[hg]                                 # (S, G) bf16
    v_b = vc_ref[hg]                                 # (S, G) bf16

    # Grouped Q projection: N = G = group_size * head_dim lanes on the MXU.
    q = jnp.dot(xq_b, wq_ref[...], preferred_element_type=jnp.float32) + bq_ref[0]
    q = q * jnp.float32(1.0 / math.sqrt(head_dim))   # fold 1/sqrt(hd) into q once
    q_b = q.astype(jnp.bfloat16)                     # (TQ, G)

    hd = head_dim
    ctx_parts = []
    for i in range(group_size):                      # per-head scores / P@V (K = hd)
        q_i = q_b[:, i * hd:(i + 1) * hd]
        k_i = k_b[:, i * hd:(i + 1) * hd]
        v_i = v_b[:, i * hd:(i + 1) * hd]
        # contract last dims of both operands: no explicit k.T (no XLU transpose).
        logits = lax.dot_general(q_i, k_i, (((1,), (1,)), ((), ())),
                                 preferred_element_type=jnp.float32)   # (TQ, S)
        logits = logits + bias[None, :]
        logits = logits - jnp.max(logits, axis=-1, keepdims=True)
        p = jnp.exp(logits)                          # f32 softmax numerics
        denom = jnp.sum(p, axis=-1, keepdims=True)   # (TQ, 1)
        ctx = jnp.dot(p.astype(jnp.bfloat16), v_i,
                      preferred_element_type=jnp.float32)              # (TQ, hd)
        ctx = ctx * pl.reciprocal(denom, approx=True)
        ctx_parts.append(ctx.astype(jnp.bfloat16))
    ctx_g = ctx_parts[0] if group_size == 1 else jnp.concatenate(ctx_parts, axis=-1)

    # Output projection for this head group (K = G lanes), accumulated over groups.
    acc_ref[...] += jnp.dot(ctx_g, wo_ref[...], preferred_element_type=jnp.float32)

    @pl.when(hg == n_head_groups - 1)
    def _finalize():
        y = xq + acc_ref[...] + bo_ref[0]            # dropout = identity (eval)
        y_ref[0] = _layer_norm(y, g1_ref[0], be1_ref[0]).astype(y_ref.dtype)


# ---------------------------------------------------- kernel 2: FFN + LN2 -----------
def _ffn_ln2_kernel(y_ref, w1_ref, b1_ref, w2_ref, b2_ref, g2_ref, be2_ref,
                    out_ref, acc_ref, *, n_pf_chunks):
    c = pl.program_id(2)
    y = y_ref[0]                                     # (TQ, H) f32

    @pl.when(c == 0)
    def _zero_acc():
        acc_ref[...] = jnp.zeros_like(acc_ref)

    h1 = jnp.dot(y.astype(jnp.bfloat16), w1_ref[...],
                 preferred_element_type=jnp.float32) + b1_ref[0]
    h1 = jnp.maximum(h1, 0.0)
    acc_ref[...] += jnp.dot(h1.astype(jnp.bfloat16), w2_ref[...],
                            preferred_element_type=jnp.float32)

    @pl.when(c == n_pf_chunks - 1)
    def _finalize():
        z = y + acc_ref[...] + b2_ref[0]             # dropout = identity (eval)
        out_ref[0] = _layer_norm(z, g2_ref[0], be2_ref[0]).astype(out_ref.dtype)


# ------------------------------------------------------------------ wrapper ---------
def encoder_layer(src, src_mask, params, *, n_heads,
                  q_tile=None, pf_tile=None, head_group=None):
    B, S, H = src.shape
    assert H % n_heads == 0
    hd = H // n_heads
    PF = params["w1"].shape[1]
    bf16, f32 = jnp.bfloat16, jnp.float32

    g = _pick_head_group(n_heads, hd) if head_group is None else head_group
    G = g * hd
    assert n_heads % g == 0 and (G % 128 == 0 or g == n_heads)
    n_hg = n_heads // g

    if q_tile is None:
        q_tile = _pick_tile(S, 512, 8)
    assert S % q_tile == 0
    n_qt = S // q_tile

    if pf_tile is None:
        pf_tile = _pick_tile(PF, 2048, 128)
    assert PF % pf_tile == 0
    n_pf = PF // pf_tile

    # Pre-cast MXU weight operands / K-V activations to bf16 and precompute the
    # additive attention-mask bias once, outside the kernel.
    src_kv = src.astype(bf16)
    mask_bias = jnp.where(src_mask > 0, 0.0, _MASK_BIAS).astype(f32)    # (B, 1, S)
    wq = params["wq"].astype(bf16)
    wk = params["wk"].astype(bf16)
    wv = params["wv"].astype(bf16)
    wo = params["wo"].astype(bf16)
    w1 = params["w1"].astype(bf16)
    w2 = params["w2"].astype(bf16)

    mib = 1024 * 1024

    def vmem_limit(nbytes):
        return int(min(120 * mib, max(32 * mib, int(1.5 * nbytes))))

    # ---------------- call 1: multi-head self-attention + residual + LayerNorm ------
    attn_kernel = functools.partial(_attn_ln1_kernel, n_head_groups=n_hg,
                                    group_size=g, head_dim=hd)

    def _const(shape):
        return pl.BlockSpec(shape, lambda b, qi, hg: (0, 0))

    def _grp_cols(rows):                 # column block of one head group
        return pl.BlockSpec((rows, G), lambda b, qi, hg: (0, hg))

    attn_in_specs = [
        pl.BlockSpec((1, q_tile, H), lambda b, qi, hg: (b, qi, 0)),    # src f32 (q tile)
        pl.BlockSpec((1, S, H),      lambda b, qi, hg: (b, 0, 0)),     # src bf16 (K/V)
        pl.BlockSpec((1, 1, S),      lambda b, qi, hg: (b, 0, 0)),     # mask bias
        _grp_cols(H), _grp_cols(1),                                    # wq, bq
        _grp_cols(H), _grp_cols(1),                                    # wk, bk
        _grp_cols(H), _grp_cols(1),                                    # wv, bv
        pl.BlockSpec((G, H), lambda b, qi, hg: (hg, 0)),               # wo (group rows)
        _const((1, H)),                                                # bo
        _const((1, H)), _const((1, H)),                                # ln1 gamma/beta
    ]

    attn_bytes = (
        2 * (4 * q_tile * H)          # f32 q-tile input (double buffered)
        + 2 * (2 * S * H)             # bf16 K/V source
        + 2 * (4 * S)                 # mask bias
        + 2 * 4 * (2 * H * G)         # wq/wk/wv/wo bf16 blocks
        + 2 * 7 * (4 * H)             # biases + LN params
        + 2 * (4 * q_tile * H)        # f32 output (LN1 activations)
        + 4 * q_tile * H              # accumulator scratch
        + 2 * (2 * S * H)             # bf16 K/V caches
    )

    y = pl.pallas_call(
        attn_kernel,
        out_shape=jax.ShapeDtypeStruct((B, S, H), f32),
        grid_spec=pltpu.PrefetchScalarGridSpec(
            num_scalar_prefetch=0,
            grid=(B, n_qt, n_hg),
            in_specs=attn_in_specs,
            out_specs=pl.BlockSpec((1, q_tile, H), lambda b, qi, hg: (b, qi, 0)),
            scratch_shapes=[
                pltpu.VMEM((q_tile, H), f32),        # attention-output accumulator
                pltpu.VMEM((n_hg, S, G), bf16),      # K cache (reused across q tiles)
                pltpu.VMEM((n_hg, S, G), bf16),      # V cache
            ],
        ),
        compiler_params=pltpu.CompilerParams(
            # qi/hg carry the K/V cache and the accumulator -> "arbitrary";
            # the batch axis stays "parallel" for megacore / dual-TC chips.
            dimension_semantics=("parallel", "arbitrary", "arbitrary"),
            vmem_limit_bytes=vmem_limit(attn_bytes),
        ),
    )(src, src_kv, mask_bias,
      wq, params["bq"], wk, params["bk"], wv, params["bv"],
      wo, params["bo"], params["g1"], params["be1"])

    # ---------------- call 2: positionwise feed-forward + residual + LayerNorm ------
    ffn_kernel = functools.partial(_ffn_ln2_kernel, n_pf_chunks=n_pf)

    def _constf(shape):
        return pl.BlockSpec(shape, lambda b, qi, c: (0, 0))

    ffn_in_specs = [
        pl.BlockSpec((1, q_tile, H), lambda b, qi, c: (b, qi, 0)),     # y (LN1 output)
        pl.BlockSpec((H, pf_tile),   lambda b, qi, c: (0, c)),         # w1 chunk
        pl.BlockSpec((1, pf_tile),   lambda b, qi, c: (0, c)),         # b1 chunk
        pl.BlockSpec((pf_tile, H),   lambda b, qi, c: (c, 0)),         # w2 chunk
        _constf((1, H)), _constf((1, H)), _constf((1, H)),             # b2, ln2 g/beta
    ]

    ffn_bytes = (
        2 * (4 * q_tile * H)          # y input
        + 2 * (2 * H * pf_tile)       # w1 chunk
        + 2 * (4 * pf_tile)           # b1 chunk
        + 2 * (2 * pf_tile * H)       # w2 chunk
        + 2 * 3 * (4 * H)             # b2 + LN params
        + 2 * (4 * q_tile * H)        # output
        + 4 * q_tile * H              # accumulator scratch
    )

    out = pl.pallas_call(
        ffn_kernel,
        out_shape=jax.ShapeDtypeStruct((B, S, H), f32),
        grid_spec=pltpu.PrefetchScalarGridSpec(
            num_scalar_prefetch=0,
            grid=(B, n_qt, n_pf),
            in_specs=ffn_in_specs,
            out_specs=pl.BlockSpec((1, q_tile, H), lambda b, qi, c: (b, qi, 0)),
            scratch_shapes=[pltpu.VMEM((q_tile, H), f32)],
        ),
        compiler_params=pltpu.CompilerParams(
            dimension_semantics=("parallel", "parallel", "arbitrary"),
            vmem_limit_bytes=vmem_limit(ffn_bytes),
        ),
    )(y, w1, params["b1"], w2, params["b2"], params["g2"], params["be2"])

    return out


# ------------------------------------------------------------------ reference -------
def reference(src, src_mask, params, *, n_heads):
    """Pure-JAX f32 reference mirroring the PyTorch module (eval mode)."""
    B, S, H = src.shape
    hd = H // n_heads
    scale = math.sqrt(hd)

    def lin(x, w, b):
        return x @ w + b[0]

    q = lin(src, params["wq"], params["bq"]).reshape(B, S, n_heads, hd).transpose(0, 2, 1, 3)
    k = lin(src, params["wk"], params["bk"]).reshape(B, S, n_heads, hd).transpose(0, 2, 1, 3)
    v = lin(src, params["wv"], params["bv"]).reshape(B, S, n_heads, hd).transpose(0, 2, 1, 3)
    energy = jnp.einsum("bhqd,bhkd->bhqk", q, k) / scale
    mask = src_mask[:, None, :, :]                        # (B,1,1,S)
    energy = jnp.where(mask > 0, energy, _MASK_BIAS)
    attn = jax.nn.softmax(energy, axis=-1)
    out = jnp.einsum("bhqk,bhkd->bhqd", attn, v).transpose(0, 2, 1, 3).reshape(B, S, H)
    out = lin(out, params["wo"], params["bo"])

    def ln(x, gamma, beta):
        mu = x.mean(-1, keepdims=True)
        var = ((x - mu) ** 2).mean(-1, keepdims=True)
        return (x - mu) * jax.lax.rsqrt(var + _LN_EPS) * gamma[0] + beta[0]

    y = ln(src + out, params["g1"], params["be1"])
    h = jnp.maximum(lin(y, params["w1"], params["b1"]), 0.0)
    h = lin(h, params["w2"], params["b2"])
    return ln(y + h, params["g2"], params["be2"])


def _make_params(key, H, PF, scale=0.1):
    keys = jax.random.split(key, 12)

    def init(k, shape):
        return (scale * jax.random.normal(k, shape)).astype(jnp.float32)

    return {
        "wq": init(keys[0], (H, H)),   "bq": init(keys[1], (1, H)),
        "wk": init(keys[2], (H, H)),   "bk": init(keys[3], (1, H)),
        "wv": init(keys[4], (H, H)),   "bv": init(keys[5], (1, H)),
        "wo": init(keys[6], (H, H)),   "bo": init(keys[7], (1, H)),
        "g1": jnp.ones((1, H), jnp.float32),  "be1": jnp.zeros((1, H), jnp.float32),
        "w1": init(keys[8], (H, PF)),  "b1": init(keys[9], (1, PF)),
        "w2": init(keys[10], (PF, H)), "b2": init(keys[11], (1, H)),
        "g2": jnp.ones((1, H), jnp.float32),  "be2": jnp.zeros((1, H), jnp.float32),
    }


if __name__ == "__main__":
    root = jax.random.PRNGKey(0)

    # --- Case 1: small toy shapes consistent with the module --------------------------
    B, S, H, NH, PF = 2, 8, 32, 4, 64
    k_p, k_x = jax.random.split(jax.random.fold_in(root, 1))
    params = _make_params(k_p, H, PF, scale=0.1)
    src = jax.random.normal(k_x, (B, S, H), jnp.float32)
    src_mask = jnp.ones((B, 1, S), jnp.float32).at[1, 0, -2:].set(0.0)

    out = jax.block_until_ready(encoder_layer(src, src_mask, params, n_heads=NH))
    ref = reference(src, src_mask, params, n_heads=NH)
    # bf16 MXU operands + approx reciprocal -> relaxed tolerance vs f32 reference.
    assert jnp.allclose(out, ref, rtol=5e-2, atol=5e-2), float(jnp.max(jnp.abs(out - ref)))

    # --- Case 2: (8,128)-aligned shapes exercising the multi-tile paths ---------------
    # n_qt=2 query tiles (K/V-cache reuse), n_hg=2 head groups (grouped accumulation),
    # n_pf=2 PF chunks (FFN accumulator).
    B, S, H, NH, PF = 2, 256, 256, 8, 512
    k_p, k_x = jax.random.split(jax.random.fold_in(root, 2))
    params = _make_params(k_p, H, PF, scale=0.05)
    src = jax.random.normal(k_x, (B, S, H), jnp.float32)
    src_mask = jnp.ones((B, 1, S), jnp.float32).at[1, 0, -7:].set(0.0)

    out = jax.block_until_ready(
        encoder_layer(src, src_mask, params, n_heads=NH,
                      q_tile=128, pf_tile=256, head_group=4))
    ref = reference(src, src_mask, params, n_heads=NH)
    assert jnp.allclose(out, ref, rtol=5e-2, atol=1e-1), float(jnp.max(jnp.abs(out - ref)))

    # TODO(synk): dropout is identity here (inference semantics); training-mode
    # stochastic dropout is not implemented.
    print("KERNEL_OK")
</pallas_src>

<mosaic_0001>
module attributes {stable_mosaic.version = 11 : i64} {
  func.func @_attn_ln1_kernel(%arg0: i32, %arg1: i32, %arg2: i32, %arg3: memref<1x8x32xf32, #tpu.memory_space<vmem>>, %arg4: memref<1x8x32xbf16, #tpu.memory_space<vmem>>, %arg5: memref<1x1x8xf32, #tpu.memory_space<vmem>>, %arg6: memref<32x32xbf16, #tpu.memory_space<vmem>>, %arg7: memref<1x32xf32, #tpu.memory_space<vmem>>, %arg8: memref<32x32xbf16, #tpu.memory_space<vmem>>, %arg9: memref<1x32xf32, #tpu.memory_space<vmem>>, %arg10: memref<32x32xbf16, #tpu.memory_space<vmem>>, %arg11: memref<1x32xf32, #tpu.memory_space<vmem>>, %arg12: memref<32x32xbf16, #tpu.memory_space<vmem>>, %arg13: memref<1x32xf32, #tpu.memory_space<vmem>>, %arg14: memref<1x32xf32, #tpu.memory_space<vmem>>, %arg15: memref<1x32xf32, #tpu.memory_space<vmem>>, %arg16: memref<1x8x32xf32, #tpu.memory_space<vmem>>, %arg17: memref<8x32xf32, #tpu.memory_space<vmem>>, %arg18: memref<1x8x32xbf16, #tpu.memory_space<vmem>>, %arg19: memref<1x8x32xbf16, #tpu.memory_space<vmem>>) attributes {dimension_semantics = [#tpu.dimension_semantics<parallel>, #tpu.dimension_semantics<arbitrary>, #tpu.dimension_semantics<arbitrary>], iteration_bounds = array<i64: 2, 1, 1>, scalar_prefetch = 0 : i64, scratch_operands = 3 : i64, tpu.core_type = #tpu.core_type<tc>, window_params = [{transform_indices = @transform_0, window_bounds = array<i64: 1, 8, 32>}, {transform_indices = @transform_1, window_bounds = array<i64: 1, 8, 32>}, {transform_indices = @transform_2, window_bounds = array<i64: 1, 1, 8>}, {transform_indices = @transform_3, window_bounds = array<i64: 32, 32>}, {transform_indices = @transform_4, window_bounds = array<i64: 1, 32>}, {transform_indices = @transform_5, window_bounds = array<i64: 32, 32>}, {transform_indices = @transform_6, window_bounds = array<i64: 1, 32>}, {transform_indices = @transform_7, window_bounds = array<i64: 32, 32>}, {transform_indices = @transform_8, window_bounds = array<i64: 1, 32>}, {transform_indices = @transform_9, window_bounds = array<i64: 32, 32>}, {pipeline_mode = #tpu.pipeline_mode<synchronous>, transform_indices = @transform_10, window_bounds = array<i64: 1, 32>}, {pipeline_mode = #tpu.pipeline_mode<synchronous>, transform_indices = @transform_11, window_bounds = array<i64: 1, 32>}, {pipeline_mode = #tpu.pipeline_mode<synchronous>, transform_indices = @transform_12, window_bounds = array<i64: 1, 32>}, {transform_indices = @transform_13, window_bounds = array<i64: 1, 8, 32>}]} {
    %c0 = arith.constant 0 : index
    %c0_0 = arith.constant 0 : index
    %c0_1 = arith.constant 0 : index
    %0 = vector.load %arg3[%c0, %c0_0, %c0_1] : memref<1x8x32xf32, #tpu.memory_space<vmem>>, vector<1x8x32xf32>
    %1 = vector.shape_cast %0 : vector<1x8x32xf32> to vector<8x32xf32>
    %2 = arith.truncf %1 : vector<8x32xf32> to vector<8x32xbf16>
    %c0_2 = arith.constant 0 : index
    %c0_3 = arith.constant 0 : index
    %c0_4 = arith.constant 0 : index
    %3 = vector.load %arg5[%c0_2, %c0_3, %c0_4] : memref<1x1x8xf32, #tpu.memory_space<vmem>>, vector<1x1x8xf32>
    %4 = vector.shape_cast %3 : vector<1x1x8xf32> to vector<8xf32>
    %c0_i32 = arith.constant 0 : i32
    %5 = arith.cmpi eq, %arg2, %c0_i32 : i32
    %6 = arith.extui %5 : i1 to i32
    %c0_i32_5 = arith.constant 0 : i32
    %7 = arith.cmpi ne, %6, %c0_i32_5 : i32
    scf.if %7 {
      %cst_42 = arith.constant 0.000000e+00 : f32
      %116 = vector.broadcast %cst_42 : f32 to vector<8x32xf32>
      %c0_43 = arith.constant 0 : index
      %c0_44 = arith.constant 0 : index
      %117 = vector.load %arg17[%c0_43, %c0_44] : memref<8x32xf32, #tpu.memory_space<vmem>>, vector<8x32xf32>
      tpu.vector_store %arg17[%c0_43, %c0_44], %116 {strides = array<i32>} : memref<8x32xf32, #tpu.memory_space<vmem>>, vector<8x32xf32>,
    } else {
    }
    %c0_i32_6 = arith.constant 0 : i32
    %8 = arith.cmpi eq, %arg1, %c0_i32_6 : i32
    %9 = arith.extui %8 : i1 to i32
    %c0_i32_7 = arith.constant 0 : i32
    %10 = arith.cmpi ne, %9, %c0_i32_7 : i32
    scf.if %10 {
      %c0_42 = arith.constant 0 : index
      %c0_43 = arith.constant 0 : index
      %c0_44 = arith.constant 0 : index
      %116 = vector.load %arg4[%c0_42, %c0_43, %c0_44] : memref<1x8x32xbf16, #tpu.memory_space<vmem>>, vector<1x8x32xbf16>
      %117 = vector.shape_cast %116 : vector<1x8x32xbf16> to vector<8x32xbf16>
      %c0_45 = arith.constant 0 : index
      %c0_46 = arith.constant 0 : index
      %118 = vector.load %arg8[%c0_45, %c0_46] : memref<32x32xbf16, #tpu.memory_space<vmem>>, vector<32x32xbf16>
      %cst_47 = arith.constant dense<0.000000e+00> : vector<8x32xf32>
      %119 = tpu.matmul %117, %118, %cst_47 {dimension_numbers = #tpu.dot_dimension_numbers<[1], [0], [0], [1], [0, 0, 1, 1], [], []>} : vector<8x32xbf16>, vector<32x32xbf16>, vector<8x32xf32> -> vector<8x32xf32>
      %c0_48 = arith.constant 0 : index
      %c0_49 = arith.constant 0 : index
      %120 = vector.load %arg9[%c0_48, %c0_49] : memref<1x32xf32, #tpu.memory_space<vmem>>, vector<1x32xf32>
      %121 = vector.shape_cast %120 : vector<1x32xf32> to vector<32xf32>
      %122 = vector.shape_cast %121 : vector<32xf32> to vector<1x32xf32>
      %123 = vector.broadcast %122 : vector<1x32xf32> to vector<8x32xf32>
      %124 = arith.addf %119, %123 : vector<8x32xf32>
      %c0_50 = arith.constant 0 : index
      %c0_51 = arith.constant 0 : index
      %125 = vector.load %arg10[%c0_50, %c0_51] : memref<32x32xbf16, #tpu.memory_space<vmem>>, vector<32x32xbf16>
      %cst_52 = arith.constant dense<0.000000e+00> : vector<8x32xf32>
      %126 = tpu.matmul %117, %125, %cst_52 {dimension_numbers = #tpu.dot_dimension_numbers<[1], [0], [0], [1], [0, 0, 1, 1], [], []>} : vector<8x32xbf16>, vector<32x32xbf16>, vector<8x32xf32> -> vector<8x32xf32>
      %c0_53 = arith.constant 0 : index
      %c0_54 = arith.constant 0 : index
      %127 = vector.load %arg11[%c0_53, %c0_54] : memref<1x32xf32, #tpu.memory_space<vmem>>, vector<1x32xf32>
      %128 = vector.shape_cast %127 : vector<1x32xf32> to vector<32xf32>
      %129 = vector.shape_cast %128 : vector<32xf32> to vector<1x32xf32>
      %130 = vector.broadcast %129 : vector<1x32xf32> to vector<8x32xf32>
      %131 = arith.addf %126, %130 : vector<8x32xf32>
      %132 = arith.truncf %124 : vector<8x32xf32> to vector<8x32xbf16>
      %133 = arith.index_cast %arg2 : i32 to index
      %c0_55 = arith.constant 0 : index
      %c0_56 = arith.constant 0 : index
      %134 = vector.load %arg18[%133, %c0_55, %c0_56] : memref<1x8x32xbf16, #tpu.memory_space<vmem>>, vector<1x8x32xbf16>
      %135 = vector.shape_cast %134 : vector<1x8x32xbf16> to vector<8x32xbf16>
      %136 = vector.shape_cast %132 : vector<8x32xbf16> to vector<1x8x32xbf16>
      tpu.vector_store %arg18[%133, %c0_55, %c0_56], %136 {strides = array<i32>} : memref<1x8x32xbf16, #tpu.memory_space<vmem>>, vector<1x8x32xbf16>,
      %137 = arith.truncf %131 : vector<8x32xf32> to vector<8x32xbf16>
      %138 = arith.index_cast %arg2 : i32 to index
      %c0_57 = arith.constant 0 : index
      %c0_58 = arith.constant 0 : index
      %139 = vector.load %arg19[%138, %c0_57, %c0_58] : memref<1x8x32xbf16, #tpu.memory_space<vmem>>, vector<1x8x32xbf16>
      %140 = vector.shape_cast %139 : vector<1x8x32xbf16> to vector<8x32xbf16>
      %141 = vector.shape_cast %137 : vector<8x32xbf16> to vector<1x8x32xbf16>
      tpu.vector_store %arg19[%138, %c0_57, %c0_58], %141 {strides = array<i32>} : memref<1x8x32xbf16, #tpu.memory_space<vmem>>, vector<1x8x32xbf16>,
    } else {
    }
    %11 = arith.index_cast %arg2 : i32 to index
    %c0_8 = arith.constant 0 : index
    %c0_9 = arith.constant 0 : index
    %12 = vector.load %arg18[%11, %c0_8, %c0_9] : memref<1x8x32xbf16, #tpu.memory_space<vmem>>, vector<1x8x32xbf16>
    %13 = vector.shape_cast %12 : vector<1x8x32xbf16> to vector<8x32xbf16>
    %14 = arith.index_cast %arg2 : i32 to index
    %c0_10 = arith.constant 0 : index
    %c0_11 = arith.constant 0 : index
    %15 = vector.load %arg19[%14, %c0_10, %c0_11] : memref<1x8x32xbf16, #tpu.memory_space<vmem>>, vector<1x8x32xbf16>
    %16 = vector.shape_cast %15 : vector<1x8x32xbf16> to vector<8x32xbf16>
    %c0_12 = arith.constant 0 : index
    %c0_13 = arith.constant 0 : index
    %17 = vector.load %arg6[%c0_12, %c0_13] : memref<32x32xbf16, #tpu.memory_space<vmem>>, vector<32x32xbf16>
    %cst = arith.constant dense<0.000000e+00> : vector<8x32xf32>
    %18 = tpu.matmul %2, %17, %cst {dimension_numbers = #tpu.dot_dimension_numbers<[1], [0], [0], [1], [0, 0, 1, 1], [], []>} : vector<8x32xbf16>, vector<32x32xbf16>, vector<8x32xf32> -> vector<8x32xf32>
    %c0_14 = arith.constant 0 : index
    %c0_15 = arith.constant 0 : index
    %19 = vector.load %arg7[%c0_14, %c0_15] : memref<1x32xf32, #tpu.memory_space<vmem>>, vector<1x32xf32>
    %20 = vector.shape_cast %19 : vector<1x32xf32> to vector<32xf32>
    %21 = vector.shape_cast %20 : vector<32xf32> to vector<1x32xf32>
    %22 = vector.broadcast %21 : vector<1x32xf32> to vector<8x32xf32>
    %23 = arith.addf %18, %22 : vector<8x32xf32>
    %cst_16 = arith.constant 0.353553385 : f32
    %24 = vector.broadcast %cst_16 : f32 to vector<8x32xf32>
    %25 = arith.mulf %23, %24 : vector<8x32xf32>
    %26 = arith.truncf %25 : vector<8x32xf32> to vector<8x32xbf16>
    %27 = vector.extract_strided_slice %26 {offsets = [0, 0], sizes = [8, 8], strides = [1, 1]} : vector<8x32xbf16> to vector<8x8xbf16>
    %28 = vector.extract_strided_slice %13 {offsets = [0, 0], sizes = [8, 8], strides = [1, 1]} : vector<8x32xbf16> to vector<8x8xbf16>
    %29 = vector.extract_strided_slice %16 {offsets = [0, 0], sizes = [8, 8], strides = [1, 1]} : vector<8x32xbf16> to vector<8x8xbf16>
    %cst_17 = arith.constant dense<0.000000e+00> : vector<8x8xf32>
    %30 = tpu.matmul %27, %28, %cst_17 {dimension_numbers = #tpu.dot_dimension_numbers<[1], [1], [0], [0], [0, 0, 1, 0], [], []>} : vector<8x8xbf16>, vector<8x8xbf16>, vector<8x8xf32> -> vector<8x8xf32>
    %31 = vector.shape_cast %4 : vector<8xf32> to vector<1x8xf32>
    %32 = vector.broadcast %31 : vector<1x8xf32> to vector<8x8xf32>
    %33 = arith.addf %30, %32 : vector<8x8xf32>
    %cst_18 = arith.constant dense<0xFF800000> : vector<8xf32>
    %34 = vector.multi_reduction <maximumf>, %33, %cst_18 [1] : vector<8x8xf32> to vector<8xf32>
    %35 = vector.shape_cast %34 : vector<8xf32> to vector<8x1xf32>
    %36 = vector.broadcast %35 : vector<8x1xf32> to vector<8x8xf32>
    %37 = arith.subf %33, %36 : vector<8x8xf32>
    %38 = math.exp %37 : vector<8x8xf32>
    %cst_19 = arith.constant dense<0.000000e+00> : vector<8xf32>
    %39 = vector.multi_reduction <add>, %38, %cst_19 [1] : vector<8x8xf32> to vector<8xf32>
    %40 = vector.shape_cast %39 : vector<8xf32> to vector<8x1xf32>
    %41 = arith.truncf %38 : vector<8x8xf32> to vector<8x8xbf16>
    %cst_20 = arith.constant dense<0.000000e+00> : vector<8x8xf32>
    %42 = tpu.matmul %41, %29, %cst_20 {dimension_numbers = #tpu.dot_dimension_numbers<[1], [0], [0], [1], [0, 0, 1, 1], [], []>} : vector<8x8xbf16>, vector<8x8xbf16>, vector<8x8xf32> -> vector<8x8xf32>
    %43 = tpu.reciprocal %40 {approx = true} : vector<8x1xf32> -> vector<8x1xf32>
    %44 = vector.broadcast %43 : vector<8x1xf32> to vector<8x8xf32>
    %45 = arith.mulf %42, %44 : vector<8x8xf32>
    %46 = arith.truncf %45 : vector<8x8xf32> to vector<8x8xbf16>
    %47 = vector.extract_strided_slice %26 {offsets = [0, 8], sizes = [8, 8], strides = [1, 1]} : vector<8x32xbf16> to vector<8x8xbf16>
    %48 = vector.extract_strided_slice %13 {offsets = [0, 8], sizes = [8, 8], strides = [1, 1]} : vector<8x32xbf16> to vector<8x8xbf16>
    %49 = vector.extract_strided_slice %16 {offsets = [0, 8], sizes = [8, 8], strides = [1, 1]} : vector<8x32xbf16> to vector<8x8xbf16>
    %cst_21 = arith.constant dense<0.000000e+00> : vector<8x8xf32>
    %50 = tpu.matmul %47, %48, %cst_21 {dimension_numbers = #tpu.dot_dimension_numbers<[1], [1], [0], [0], [0, 0, 1, 0], [], []>} : vector<8x8xbf16>, vector<8x8xbf16>, vector<8x8xf32> -> vector<8x8xf32>
    %51 = vector.shape_cast %4 : vector<8xf32> to vector<1x8xf32>
    %52 = vector.broadcast %51 : vector<1x8xf32> to vector<8x8xf32>
    %53 = arith.addf %50, %52 : vector<8x8xf32>
    %cst_22 = arith.constant dense<0xFF800000> : vector<8xf32>
    %54 = vector.multi_reduction <maximumf>, %53, %cst_22 [1] : vector<8x8xf32> to vector<8xf32>
    %55 = vector.shape_cast %54 : vector<8xf32> to vector<8x1xf32>
    %56 = vector.broadcast %55 : vector<8x1xf32> to vector<8x8xf32>
    %57 = arith.subf %53, %56 : vector<8x8xf32>
    %58 = math.exp %57 : vector<8x8xf32>
    %cst_23 = arith.constant dense<0.000000e+00> : vector<8xf32>
    %59 = vector.multi_reduction <add>, %58, %cst_23 [1] : vector<8x8xf32> to vector<8xf32>
    %60 = vector.shape_cast %59 : vector<8xf32> to vector<8x1xf32>
    %61 = arith.truncf %58 : vector<8x8xf32> to vector<8x8xbf16>
    %cst_24 = arith.constant dense<0.000000e+00> : vector<8x8xf32>
    %62 = tpu.matmul %61, %49, %cst_24 {dimension_numbers = #tpu.dot_dimension_numbers<[1], [0], [0], [1], [0, 0, 1, 1], [], []>} : vector<8x8xbf16>, vector<8x8xbf16>, vector<8x8xf32> -> vector<8x8xf32>
    %63 = tpu.reciprocal %60 {approx = true} : vector<8x1xf32> -> vector<8x1xf32>
    %64 = vector.broadcast %63 : vector<8x1xf32> to vector<8x8xf32>
    %65 = arith.mulf %62, %64 : vector<8x8xf32>
    %66 = arith.truncf %65 : vector<8x8xf32> to vector<8x8xbf16>
    %67 = vector.extract_strided_slice %26 {offsets = [0, 16], sizes = [8, 8], strides = [1, 1]} : vector<8x32xbf16> to vector<8x8xbf16>
    %68 = vector.extract_strided_slice %13 {offsets = [0, 16], sizes = [8, 8], strides = [1, 1]} : vector<8x32xbf16> to vector<8x8xbf16>
    %69 = vector.extract_strided_slice %16 {offsets = [0, 16], sizes = [8, 8], strides = [1, 1]} : vector<8x32xbf16> to vector<8x8xbf16>
    %cst_25 = arith.constant dense<0.000000e+00> : vector<8x8xf32>
    %70 = tpu.matmul %67, %68, %cst_25 {dimension_numbers = #tpu.dot_dimension_numbers<[1], [1], [0], [0], [0, 0, 1, 0], [], []>} : vector<8x8xbf16>, vector<8x8xbf16>, vector<8x8xf32> -> vector<8x8xf32>
    %71 = vector.shape_cast %4 : vector<8xf32> to vector<1x8xf32>
    %72 = vector.broadcast %71 : vector<1x8xf32> to vector<8x8xf32>
    %73 = arith.addf %70, %72 : vector<8x8xf32>
    %cst_26 = arith.constant dense<0xFF800000> : vector<8xf32>
    %74 = vector.multi_reduction <maximumf>, %73, %cst_26 [1] : vector<8x8xf32> to vector<8xf32>
    %75 = vector.shape_cast %74 : vector<8xf32> to vector<8x1xf32>
    %76 = vector.broadcast %75 : vector<8x1xf32> to vector<8x8xf32>
    %77 = arith.subf %73, %76 : vector<8x8xf32>
    %78 = math.exp %77 : vector<8x8xf32>
    %cst_27 = arith.constant dense<0.000000e+00> : vector<8xf32>
    %79 = vector.multi_reduction <add>, %78, %cst_27 [1] : vector<8x8xf32> to vector<8xf32>
    %80 = vector.shape_cast %79 : vector<8xf32> to vector<8x1xf32>
    %81 = arith.truncf %78 : vector<8x8xf32> to vector<8x8xbf16>
    %cst_28 = arith.constant dense<0.000000e+00> : vector<8x8xf32>
    %82 = tpu.matmul %81, %69, %cst_28 {dimension_numbers = #tpu.dot_dimension_numbers<[1], [0], [0], [1], [0, 0, 1, 1], [], []>} : vector<8x8xbf16>, vector<8x8xbf16>, vector<8x8xf32> -> vector<8x8xf32>
    %83 = tpu.reciprocal %80 {approx = true} : vector<8x1xf32> -> vector<8x1xf32>
    %84 = vector.broadcast %83 : vector<8x1xf32> to vector<8x8xf32>
    %85 = arith.mulf %82, %84 : vector<8x8xf32>
    %86 = arith.truncf %85 : vector<8x8xf32> to vector<8x8xbf16>
    %87 = vector.extract_strided_slice %26 {offsets = [0, 24], sizes = [8, 8], strides = [1, 1]} : vector<8x32xbf16> to vector<8x8xbf16>
    %88 = vector.extract_strided_slice %13 {offsets = [0, 24], sizes = [8, 8], strides = [1, 1]} : vector<8x32xbf16> to vector<8x8xbf16>
    %89 = vector.extract_strided_slice %16 {offsets = [0, 24], sizes = [8, 8], strides = [1, 1]} : vector<8x32xbf16> to vector<8x8xbf16>
    %cst_29 = arith.constant dense<0.000000e+00> : vector<8x8xf32>
    %90 = tpu.matmul %87, %88, %cst_29 {dimension_numbers = #tpu.dot_dimension_numbers<[1], [1], [0], [0], [0, 0, 1, 0], [], []>} : vector<8x8xbf16>, vector<8x8xbf16>, vector<8x8xf32> -> vector<8x8xf32>
    %91 = vector.shape_cast %4 : vector<8xf32> to vector<1x8xf32>
    %92 = vector.broadcast %91 : vector<1x8xf32> to vector<8x8xf32>
    %93 = arith.addf %90, %92 : vector<8x8xf32>
    %cst_30 = arith.constant dense<0xFF800000> : vector<8xf32>
    %94 = vector.multi_reduction <maximumf>, %93, %cst_30 [1] : vector<8x8xf32> to vector<8xf32>
    %95 = vector.shape_cast %94 : vector<8xf32> to vector<8x1xf32>
    %96 = vector.broadcast %95 : vector<8x1xf32> to vector<8x8xf32>
    %97 = arith.subf %93, %96 : vector<8x8xf32>
    %98 = math.exp %97 : vector<8x8xf32>
    %cst_31 = arith.constant dense<0.000000e+00> : vector<8xf32>
    %99 = vector.multi_reduction <add>, %98, %cst_31 [1] : vector<8x8xf32> to vector<8xf32>
    %100 = vector.shape_cast %99 : vector<8xf32> to vector<8x1xf32>
    %101 = arith.truncf %98 : vector<8x8xf32> to vector<8x8xbf16>
    %cst_32 = arith.constant dense<0.000000e+00> : vector<8x8xf32>
    %102 = tpu.matmul %101, %89, %cst_32 {dimension_numbers = #tpu.dot_dimension_numbers<[1], [0], [0], [1], [0, 0, 1, 1], [], []>} : vector<8x8xbf16>, vector<8x8xbf16>, vector<8x8xf32> -> vector<8x8xf32>
    %103 = tpu.reciprocal %100 {approx = true} : vector<8x1xf32> -> vector<8x1xf32>
    %104 = vector.broadcast %103 : vector<8x1xf32> to vector<8x8xf32>
    %105 = arith.mulf %102, %104 : vector<8x8xf32>
    %106 = arith.truncf %105 : vector<8x8xf32> to vector<8x8xbf16>
    %107 = tpu.concatenate %46, %66, %86, %106 in 1 : vector<8x8xbf16>, vector<8x8xbf16>, vector<8x8xbf16>, vector<8x8xbf16> -> vector<8x32xbf16>
    %c0_33 = arith.constant 0 : index
    %c0_34 = arith.constant 0 : index
    %108 = vector.load %arg17[%c0_33, %c0_34] : memref<8x32xf32, #tpu.memory_space<vmem>>, vector<8x32xf32>
    %c0_35 = arith.constant 0 : index
    %c0_36 = arith.constant 0 : index
    %109 = vector.load %arg12[%c0_35, %c0_36] : memref<32x32xbf16, #tpu.memory_space<vmem>>, vector<32x32xbf16>
    %cst_37 = arith.constant dense<0.000000e+00> : vector<8x32xf32>
    %110 = tpu.matmul %107, %109, %cst_37 {dimension_numbers = #tpu.dot_dimension_numbers<[1], [0], [0], [1], [0, 0, 1, 1], [], []>} : vector<8x32xbf16>, vector<32x32xbf16>, vector<8x32xf32> -> vector<8x32xf32>
    %111 = arith.addf %108, %110 : vector<8x32xf32>
    %c0_38 = arith.constant 0 : index
    %c0_39 = arith.constant 0 : index
    %112 = vector.load %arg17[%c0_38, %c0_39] : memref<8x32xf32, #tpu.memory_space<vmem>>, vector<8x32xf32>
    tpu.vector_store %arg17[%c0_38, %c0_39], %111 {strides = array<i32>} : memref<8x32xf32, #tpu.memory_space<vmem>>, vector<8x32xf32>,
    %c0_i32_40 = arith.constant 0 : i32
    %113 = arith.cmpi eq, %arg2, %c0_i32_40 : i32
    %114 = arith.extui %113 : i1 to i32
    %c0_i32_41 = arith.constant 0 : i32
    %115 = arith.cmpi ne, %114, %c0_i32_41 : i32
    scf.if %115 {
      %c0_42 = arith.constant 0 : index
      %c0_43 = arith.constant 0 : index
      %116 = vector.load %arg17[%c0_42, %c0_43] : memref<8x32xf32, #tpu.memory_space<vmem>>, vector<8x32xf32>
      %117 = arith.addf %1, %116 : vector<8x32xf32>
      %c0_44 = arith.constant 0 : index
      %c0_45 = arith.constant 0 : index
      %118 = vector.load %arg13[%c0_44, %c0_45] : memref<1x32xf32, #tpu.memory_space<vmem>>, vector<1x32xf32>
      %119 = vector.shape_cast %118 : vector<1x32xf32> to vector<32xf32>
      %120 = vector.shape_cast %119 : vector<32xf32> to vector<1x32xf32>
      %121 = vector.broadcast %120 : vector<1x32xf32> to vector<8x32xf32>
      %122 = arith.addf %117, %121 : vector<8x32xf32>
      %c0_46 = arith.constant 0 : index
      %c0_47 = arith.constant 0 : index
      %123 = vector.load %arg14[%c0_46, %c0_47] : memref<1x32xf32, #tpu.memory_space<vmem>>, vector<1x32xf32>
      %124 = vector.shape_cast %123 : vector<1x32xf32> to vector<32xf32>
      %c0_48 = arith.constant 0 : index
      %c0_49 = arith.constant 0 : index
      %125 = vector.load %arg15[%c0_48, %c0_49] : memref<1x32xf32, #tpu.memory_space<vmem>>, vector<1x32xf32>
      %126 = vector.shape_cast %125 : vector<1x32xf32> to vector<32xf32>
      %cst_50 = arith.constant dense<0.000000e+00> : vector<8xf32>
      %127 = vector.multi_reduction <add>, %122, %cst_50 [1] : vector<8x32xf32> to vector<8xf32>
      %128 = vector.shape_cast %127 : vector<8xf32> to vector<8x1xf32>
      %cst_51 = arith.constant 3.200000e+01 : f32
      %129 = vector.broadcast %cst_51 : f32 to vector<8x1xf32>
      %130 = arith.divf %128, %129 : vector<8x1xf32>
      %131 = vector.broadcast %130 : vector<8x1xf32> to vector<8x32xf32>
      %132 = arith.subf %122, %131 : vector<8x32xf32>
      %133 = arith.mulf %132, %132 : vector<8x32xf32>
      %cst_52 = arith.constant dense<0.000000e+00> : vector<8xf32>
      %134 = vector.multi_reduction <add>, %133, %cst_52 [1] : vector<8x32xf32> to vector<8xf32>
      %135 = vector.shape_cast %134 : vector<8xf32> to vector<8x1xf32>
      %cst_53 = arith.constant 3.200000e+01 : f32
      %136 = vector.broadcast %cst_53 : f32 to vector<8x1xf32>
      %137 = arith.divf %135, %136 : vector<8x1xf32>
      %138 = vector.broadcast %130 : vector<8x1xf32> to vector<8x32xf32>
      %139 = arith.subf %122, %138 : vector<8x32xf32>
      %cst_54 = arith.constant 9.99999974E-6 : f32
      %140 = vector.broadcast %cst_54 : f32 to vector<8x1xf32>
      %141 = arith.addf %137, %140 : vector<8x1xf32>
      %142 = math.rsqrt %141 : vector<8x1xf32>
      %143 = vector.broadcast %142 : vector<8x1xf32> to vector<8x32xf32>
      %144 = arith.mulf %139, %143 : vector<8x32xf32>
      %145 = vector.shape_cast %124 : vector<32xf32> to vector<1x32xf32>
      %146 = vector.broadcast %145 : vector<1x32xf32> to vector<8x32xf32>
      %147 = arith.mulf %144, %146 : vector<8x32xf32>
      %148 = vector.shape_cast %126 : vector<32xf32> to vector<1x32xf32>
      %149 = vector.broadcast %148 : vector<1x32xf32> to vector<8x32xf32>
      %150 = arith.addf %147, %149 : vector<8x32xf32>
      %c0_55 = arith.constant 0 : index
      %c0_56 = arith.constant 0 : index
      %c0_57 = arith.constant 0 : index
      %151 = vector.load %arg16[%c0_55, %c0_56, %c0_57] : memref<1x8x32xf32, #tpu.memory_space<vmem>>, vector<1x8x32xf32>
      %152 = vector.shape_cast %151 : vector<1x8x32xf32> to vector<8x32xf32>
      %153 = vector.shape_cast %150 : vector<8x32xf32> to vector<1x8x32xf32>
      tpu.vector_store %arg16[%c0_55, %c0_56, %c0_57], %153 {strides = array<i32>} : memref<1x8x32xf32, #tpu.memory_space<vmem>>, vector<1x8x32xf32>,
    } else {
    }
    return
  }
  func.func @transform_0(%arg0: i32, %arg1: i32, %arg2: i32) -> (i32, i32, i32) {
    %c0_i32 = arith.constant 0 : i32
    %c0_i32_0 = arith.constant 0 : i32
    return %arg0, %arg1, %c0_i32 : i32, i32, i32
  }
  func.func @transform_1(%arg0: i32, %arg1: i32, %arg2: i32) -> (i32, i32, i32) {
    %c0_i32 = arith.constant 0 : i32
    %c0_i32_0 = arith.constant 0 : i32
    %c0_i32_1 = arith.constant 0 : i32
    return %arg0, %c0_i32, %c0_i32_0 : i32, i32, i32
  }
  func.func @transform_2(%arg0: i32, %arg1: i32, %arg2: i32) -> (i32, i32, i32) {
    %c0_i32 = arith.constant 0 : i32
    %c0_i32_0 = arith.constant 0 : i32
    %c0_i32_1 = arith.constant 0 : i32
    return %arg0, %c0_i32, %c0_i32_0 : i32, i32, i32
  }
  func.func @transform_3(%arg0: i32, %arg1: i32, %arg2: i32) -> (i32, i32) {
    %c0_i32 = arith.constant 0 : i32
    %c0_i32_0 = arith.constant 0 : i32
    return %c0_i32, %arg2 : i32, i32
  }
  func.func @transform_4(%arg0: i32, %arg1: i32, %arg2: i32) -> (i32, i32) {
    %c0_i32 = arith.constant 0 : i32
    %c0_i32_0 = arith.constant 0 : i32
    return %c0_i32, %arg2 : i32, i32
  }
  func.func @transform_5(%arg0: i32, %arg1: i32, %arg2: i32) -> (i32, i32) {
    %c0_i32 = arith.constant 0 : i32
    %c0_i32_0 = arith.constant 0 : i32
    return %c0_i32, %arg2 : i32, i32
  }
  func.func @transform_6(%arg0: i32, %arg1: i32, %arg2: i32) -> (i32, i32) {
    %c0_i32 = arith.constant 0 : i32
    %c0_i32_0 = arith.constant 0 : i32
    return %c0_i32, %arg2 : i32, i32
  }
  func.func @transform_7(%arg0: i32, %arg1: i32, %arg2: i32) -> (i32, i32) {
    %c0_i32 = arith.constant 0 : i32
    %c0_i32_0 = arith.constant 0 : i32
    return %c0_i32, %arg2 : i32, i32
  }
  func.func @transform_8(%arg0: i32, %arg1: i32, %arg2: i32) -> (i32, i32) {
    %c0_i32 = arith.constant 0 : i32
    %c0_i32_0 = arith.constant 0 : i32
    return %c0_i32, %arg2 : i32, i32
  }
  func.func @transform_9(%arg0: i32, %arg1: i32, %arg2: i32) -> (i32, i32) {
    %c0_i32 = arith.constant 0 : i32
    %c0_i32_0 = arith.constant 0 : i32
    return %arg2, %c0_i32 : i32, i32
  }
  func.func @transform_10(%arg0: i32, %arg1: i32, %arg2: i32) -> (i32, i32) {
    %c0_i32 = arith.constant 0 : i32
    %c0_i32_0 = arith.constant 0 : i32
    %c0_i32_1 = arith.constant 0 : i32
    return %c0_i32, %c0_i32_0 : i32, i32
  }
  func.func @transform_11(%arg0: i32, %arg1: i32, %arg2: i32) -> (i32, i32) {
    %c0_i32 = arith.constant 0 : i32
    %c0_i32_0 = arith.constant 0 : i32
    %c0_i32_1 = arith.constant 0 : i32
    return %c0_i32, %c0_i32_0 : i32, i32
  }
  func.func @transform_12(%arg0: i32, %arg1: i32, %arg2: i32) -> (i32, i32) {
    %c0_i32 = arith.constant 0 : i32
    %c0_i32_0 = arith.constant 0 : i32
    %c0_i32_1 = arith.constant 0 : i32
    return %c0_i32, %c0_i32_0 : i32, i32
  }
  func.func @transform_13(%arg0: i32, %arg1: i32, %arg2: i32) -> (i32, i32, i32) {
    %c0_i32 = arith.constant 0 : i32
    %c0_i32_0 = arith.constant 0 : i32
    return %arg0, %arg1, %c0_i32 : i32, i32, i32
  }
}

</mosaic_0001>

<llo_original>
// kernel: tpu_custom_call.1
$region0: #{tpu_custom_call.1}
  #allocation0 [shape = 'u32[]', space=smem, size = 0x4, offset = 0x4, fixed_abs, tag = 'smem constant byte address 0x4 - core index']
  #allocation1 [shape = 'u32[144,128]{1,0:T(1,128)}', space=vmem, size = 0x12000, scoped, tag = 'internal scratch']
  #allocation2 [shape = 'f32[8,32]{1,0:T(8,128)}', space=vmem, size = 0x1000, scoped, tag = 'scratch operand']
  #allocation3 [shape = 'bf16[1,8,32]{2,1,0:T(8,128)(2,1)}', space=vmem, size = 0x800, scoped, tag = 'scratch operand']
  #allocation4 [shape = 'bf16[1,8,32]{2,1,0:T(8,128)(2,1)}', space=vmem, size = 0x800, scoped, tag = 'scratch operand']
  %s0 = inlined_call_operand.hbm [shape: f32[2,8,32], index: 0, kind: input, shape index: {}]
  %s1 = inlined_call_operand.hbm [shape: bf16[2,8,32], index: 1, kind: input, shape index: {}]
  %s2 = inlined_call_operand.hbm [shape: f32[2,1,8], index: 2, kind: input, shape index: {}]
  %s3 = inlined_call_operand.hbm [shape: bf16[32,32], index: 3, kind: input, shape index: {}]
  %s4 = inlined_call_operand.hbm [shape: f32[1,32], index: 4, kind: input, shape index: {}]
  %s5 = inlined_call_operand.hbm [shape: bf16[32,32], index: 5, kind: input, shape index: {}]
  %s6 = inlined_call_operand.hbm [shape: f32[1,32], index: 6, kind: input, shape index: {}]
  %s7 = inlined_call_operand.hbm [shape: bf16[32,32], index: 7, kind: input, shape index: {}]
  %s8 = inlined_call_operand.hbm [shape: f32[1,32], index: 8, kind: input, shape index: {}]
  %s9 = inlined_call_operand.vmem [shape: bf16[32,32], index: 9, kind: input, shape index: {}]
  %s10 = inlined_call_operand.vmem [shape: f32[1,32], index: 10, kind: input, shape index: {}]
  %s11 = inlined_call_operand.vmem [shape: f32[1,32], index: 11, kind: input, shape index: {}]
  %s12 = inlined_call_operand.vmem [shape: f32[1,32], index: 12, kind: input, shape index: {}]
  %s13 = inlined_call_operand.hbm [shape: f32[2,8,32], index: 13, kind: output, shape index: {}]
  %s14 = sld [smem:[#allocation0]]
  $region133: #{tpu_custom_call.1} parent=0
    _
  %s16 = ssub.s32 1, %s14
  %s17 = scalar_select 0, %s16, %s14
  $region1: #{tpu_custom_call.1} parent=0
    #allocation5 [shape = 'u8[8192]{0}', space=vmem, size = 0x2000, scoped, tag = 'input window, operand 0']
    #allocation6 [shape = 's32[2]{0}', space=sflag, size = 0x8, scoped, tag = 'scoped memory for tpu_custom_call.1']
    #allocation7 [shape = 's32[2]{0}', space=sflag, size = 0x8, scoped, tag = 'scoped memory for tpu_custom_call.1']
    #allocation8 [shape = 'u8[4096]{0}', space=vmem, size = 0x1000, scoped, tag = 'input window, operand 1']
    #allocation9 [shape = 's32[2]{0}', space=sflag, size = 0x8, scoped, tag = 'scoped memory for tpu_custom_call.1']
    #allocation10 [shape = 'u8[1024]{0}', space=vmem, size = 0x400, scoped, tag = 'input window, operand 2']
    #allocation11 [shape = 'u8[8192]{0}', space=vmem, size = 0x2000, scoped, tag = 'input window, operand 3, single buffered']
    #allocation12 [shape = 's32[1]{0}', space=sflag, size = 0x4, scoped, tag = 'scoped memory for tpu_custom_call.1']
    #allocation13 [shape = 'u8[512]{0}', space=vmem, size = 0x400, scoped, tag = 'input window, operand 4, single buffered']
    #allocation14 [shape = 'u8[8192]{0}', space=vmem, size = 0x2000, scoped, tag = 'input window, operand 5, single buffered']
    #allocation15 [shape = 's32[1]{0}', space=sflag, size = 0x4, scoped, tag = 'scoped memory for tpu_custom_call.1']
    #allocation16 [shape = 'u8[512]{0}', space=vmem, size = 0x400, scoped, tag = 'input window, operand 6, single buffered']
    #allocation17 [shape = 'u8[8192]{0}', space=vmem, size = 0x2000, scoped, tag = 'input window, operand 7, single buffered']
    #allocation18 [shape = 's32[1]{0}', space=sflag, size = 0x4, scoped, tag = 'scoped memory for tpu_custom_call.1']
    #allocation19 [shape = 'u8[512]{0}', space=vmem, size = 0x400, scoped, tag = 'input window, operand 8, single buffered']
    #allocation20 [shape = 'u8[8192]{0}', space=vmem, size = 0x2000, scoped, tag = 'output window, operand 0']
    %18 = vsyncpa [#allocation6], 0
    %s19 = scalar_lea.sflag [#allocation6], 1
    %20 = vsyncpa %s19, 0
    %21 = vsyncpa [#allocation9], 0
    %s22 = scalar_lea.sflag [#allocation9], 1
    %23 = vsyncpa %s22, 0
    %24 = vsyncpa [#allocation12], 0
    %25 = vsyncpa [#allocation15], 0
    %26 = vsyncpa [#allocation18], 0
    %27 = vsyncpa [#allocation7], 0
    %s28 = scalar_lea.sflag [#allocation7], 1
    %29 = vsyncpa %s28, 0
    loop: start=0, step=1, limit=4
    $region2: #{tpu_custom_call.1} parent=1 // loop_pre_header
      _
    $region3: #{tpu_custom_call.1} parent=1 // loop_header
      %s31 = sphi 0, %s35
      %p32 = scmp.ge.s32.totalorder %s31, 4
      %s38 = sphi 0, %s57
      %s39 = sphi 0, %s53
      %s40 = sphi 0, %s49
      %s41 = sphi 0, %s38
      %s42 = sphi 0, %s39
      %s43 = sphi 0, %s40
      %s44 = sphi 0, %s41
      %s45 = sphi 0, %s42
      %s46 = sphi 0, %s43
      %s62 = sphi 0, %s64
      %s65 = sphi 0, %s62
      %s66 = sphi 0, %s65
      %s82 = sphi 0, %s66
      %s88 = sphi 0, %s90
      %s91 = sphi 0, %s88
      %s92 = sphi 0, %s91
      %s108 = sphi 0, %s92
      %s114 = sphi 0, %s116
      %s117 = sphi 0, %s114
      %s118 = sphi 0, %s117
      %s134 = sphi 0, %s118
      %s140 = sphi 0, %s142
      %s143 = sphi 0, %s140
      %s144 = sphi 0, %s143
      %s160 = sphi 0, %s144
      %s166 = sphi 0, %s168
      %s169 = sphi 0, %s166
      %s170 = sphi 0, %s169
      %s186 = sphi 0, %s170
      %s192 = sphi 0, %s194
      %s195 = sphi 0, %s192
      %s196 = sphi 0, %s195
      %s212 = sphi 0, %s196
      %s218 = sphi 0, %s220
      %s221 = sphi 0, %s218
      %s222 = sphi 0, %s221
      %s238 = sphi 0, %s222
      %s244 = sphi 0, %s246
      %s247 = sphi 0, %s244
      %s248 = sphi 0, %s247
      %s264 = sphi 0, %s248
      %s270 = sphi 0, %s272
      %s273 = sphi 0, %s270
      %s274 = sphi 0, %s273
      %s290 = sphi 0, %s274
      %s296 = sphi 0, %s298
      %s299 = sphi 0, %s296
      %s300 = sphi 0, %s299
      %s316 = sphi 0, %s300
      %s320 = sphi 0, %s320
      %s322 = sphi 0, %s320
      %s323 = sphi 0, %s322
      %s337 = sphi 0, %s323
      %s341 = sphi 0, %s341
      %s343 = sphi 0, %s341
      %s344 = sphi 0, %s343
      %s358 = sphi 0, %s344
      %s362 = sphi 0, %s362
      %s364 = sphi 0, %s362
      %s365 = sphi 0, %s364
      %s379 = sphi 0, %s365
      %s387 = sphi 0, %s389
      %s390 = sphi 0, %s387
      %s391 = sphi 0, %s390
      %s407 = sphi 0, %s391
    $region4: #{tpu_custom_call.1} parent=1 // loop_header_branch
      %34 = sbr.rel (%p32) target = $region8
    $region5: #{tpu_custom_call.1} parent=1 // loop_body
      %s36 = ssub.s32 %s31, 1
      %s37 = ssub.s32 %s31, 2
      %s47 = sadd.s32 1, %s40
      %p48 = scmp.ge.s32.totalorder %s47, 1
      %s49 = scalar_select %p48, 0, %s47
      %s50 = sadd.s32 1, %s39
      %s51 = scalar_select %p48, %s50, %s39
      %p52 = scmp.ge.s32.totalorder %s51, 1
      %s53 = scalar_select %p52, 0, %s51
      %s54 = sadd.s32 1, %s38
      %s55 = scalar_select %p52, %s54, %s38
      %p56 = scmp.ge.s32.totalorder %s55, 2
      %s57 = scalar_select %p56, 0, %s55
      %s58 = ssub.s32 %s38, %s57
      %s59 = ssub.s32 %s39, %s53
      %s60 = sor.u32 %s58, %s59
      %p61 = scmp.eq.s32.totalorder %s60, 0
      %s63 = sadd.s32 %s62, 1
      %s64 = scalar_select %p61, %s62, %s63
      %p67 = pneg %p61
      %p68 = scmp.eq.s32.totalorder %s31, 1
      %p69 = por %p67, %p68
      %p70 = scmp.ne.s32.totalorder %s62, %s65
      %p71 = scmp.eq.s32.totalorder %s31, 0
      %p72 = por %p70, %p71
      %p73 = scmp.ne.s32.totalorder %s62, %s65
      %p74 = scmp.eq.s32.totalorder %s36, 1
      %p75 = por %p73, %p74
      %p76 = scmp.ne.s32.totalorder %s65, %s66
      %p77 = scmp.eq.s32.totalorder %s36, 0
      %p78 = por %p76, %p77
      %p79 = scmp.ne.s32.totalorder %s65, %s66
      %p80 = scmp.eq.s32.totalorder %s37, 1
      %p81 = por %p79, %p80
      %p83 = scmp.ne.s32.totalorder %s66, %s82
      %p84 = scmp.eq.s32.totalorder %s37, 0
      %p85 = por %p83, %p84
      %s86 = ssub.s32 %s38, %s57
      %p87 = scmp.eq.s32.totalorder %s86, 0
      %s89 = sadd.s32 %s88, 1
      %s90 = scalar_select %p87, %s88, %s89
      %p93 = pneg %p87
      %p94 = scmp.eq.s32.totalorder %s31, 1
      %p95 = por %p93, %p94
      %p96 = scmp.ne.s32.totalorder %s88, %s91
      %p97 = scmp.eq.s32.totalorder %s31, 0
      %p98 = por %p96, %p97
      %p99 = scmp.ne.s32.totalorder %s88, %s91
      %p100 = scmp.eq.s32.totalorder %s36, 1
      %p101 = por %p99, %p100
      %p102 = scmp.ne.s32.totalorder %s91, %s92
      %p103 = scmp.eq.s32.totalorder %s36, 0
      %p104 = por %p102, %p103
      %p105 = scmp.ne.s32.totalorder %s91, %s92
      %p106 = scmp.eq.s32.totalorder %s37, 1
      %p107 = por %p105, %p106
      %p109 = scmp.ne.s32.totalorder %s92, %s108
      %p110 = scmp.eq.s32.totalorder %s37, 0
      %p111 = por %p109, %p110
      %s112 = ssub.s32 %s38, %s57
      %p113 = scmp.eq.s32.totalorder %s112, 0
      %s115 = sadd.s32 %s114, 1
      %s116 = scalar_select %p113, %s114, %s115
      %p119 = pneg %p113
      %p120 = scmp.eq.s32.totalorder %s31, 1
      %p121 = por %p119, %p120
      %p122 = scmp.ne.s32.totalorder %s114, %s117
      %p123 = scmp.eq.s32.totalorder %s31, 0
      %p124 = por %p122, %p123
      %p125 = scmp.ne.s32.totalorder %s114, %s117
      %p126 = scmp.eq.s32.totalorder %s36, 1
      %p127 = por %p125, %p126
      %p128 = scmp.ne.s32.totalorder %s117, %s118
      %p129 = scmp.eq.s32.totalorder %s36, 0
      %p130 = por %p128, %p129
      %p131 = scmp.ne.s32.totalorder %s117, %s118
      %p132 = scmp.eq.s32.totalorder %s37, 1
      %p133 = por %p131, %p132
      %p135 = scmp.ne.s32.totalorder %s118, %s134
      %p136 = scmp.eq.s32.totalorder %s37, 0
      %p137 = por %p135, %p136
      %s138 = ssub.s32 %s40, %s49
      %p139 = scmp.eq.s32.totalorder %s138, 0
      %s141 = sadd.s32 %s140, 1
      %s142 = scalar_select %p139, %s140, %s141
      %p145 = pneg %p139
      %p146 = scmp.eq.s32.totalorder %s31, 1
      %p147 = por %p145, %p146
      %p148 = scmp.ne.s32.totalorder %s140, %s143
      %p149 = scmp.eq.s32.totalorder %s31, 0
      %p150 = por %p148, %p149
      %p151 = scmp.ne.s32.totalorder %s140, %s143
      %p152 = scmp.eq.s32.totalorder %s36, 1
      %p153 = por %p151, %p152
      %p154 = scmp.ne.s32.totalorder %s143, %s144
      %p155 = scmp.eq.s32.totalorder %s36, 0
      %p156 = por %p154, %p155
      %p157 = scmp.ne.s32.totalorder %s143, %s144
      %p158 = scmp.eq.s32.totalorder %s37, 1
      %p159 = por %p157, %p158
      %p161 = scmp.ne.s32.totalorder %s144, %s160
      %p162 = scmp.eq.s32.totalorder %s37, 0
      %p163 = por %p161, %p162
      %s164 = ssub.s32 %s40, %s49
      %p165 = scmp.eq.s32.totalorder %s164, 0
      %s167 = sadd.s32 %s166, 1
      %s168 = scalar_select %p165, %s166, %s167
      %p171 = pneg %p165
      %p172 = scmp.eq.s32.totalorder %s31, 1
      %p173 = por %p171, %p172
      %p174 = scmp.ne.s32.totalorder %s166, %s169
      %p175 = scmp.eq.s32.totalorder %s31, 0
      %p176 = por %p174, %p175
      %p177 = scmp.ne.s32.totalorder %s166, %s169
      %p178 = scmp.eq.s32.totalorder %s36, 1
      %p179 = por %p177, %p178
      %p180 = scmp.ne.s32.totalorder %s169, %s170
      %p181 = scmp.eq.s32.totalorder %s36, 0
      %p182 = por %p180, %p181
      %p183 = scmp.ne.s32.totalorder %s169, %s170
      %p184 = scmp.eq.s32.totalorder %s37, 1
      %p185 = por %p183, %p184
      %p187 = scmp.ne.s32.totalorder %s170, %s186
      %p188 = scmp.eq.s32.totalorder %s37, 0
      %p189 = por %p187, %p188
      %s190 = ssub.s32 %s40, %s49
      %p191 = scmp.eq.s32.totalorder %s190, 0
      %s193 = sadd.s32 %s192, 1
      %s194 = scalar_select %p191, %s192, %s193
      %p197 = pneg %p191
      %p198 = scmp.eq.s32.totalorder %s31, 1
      %p199 = por %p197, %p198
      %p200 = scmp.ne.s32.totalorder %s192, %s195
      %p201 = scmp.eq.s32.totalorder %s31, 0
      %p202 = por %p200, %p201
      %p203 = scmp.ne.s32.totalorder %s192, %s195
      %p204 = scmp.eq.s32.totalorder %s36, 1
      %p205 = por %p203, %p204
      %p206 = scmp.ne.s32.totalorder %s195, %s196
      %p207 = scmp.eq.s32.totalorder %s36, 0
      %p208 = por %p206, %p207
      %p209 = scmp.ne.s32.totalorder %s195, %s196
      %p210 = scmp.eq.s32.totalorder %s37, 1
      %p211 = por %p209, %p210
      %p213 = scmp.ne.s32.totalorder %s196, %s212
      %p214 = scmp.eq.s32.totalorder %s37, 0
      %p215 = por %p213, %p214
      %s216 = ssub.s32 %s40, %s49
      %p217 = scmp.eq.s32.totalorder %s216, 0
      %s219 = sadd.s32 %s218, 1
      %s220 = scalar_select %p217, %s218, %s219
      %p223 = pneg %p217
      %p224 = scmp.eq.s32.totalorder %s31, 1
      %p225 = por %p223, %p224
      %p226 = scmp.ne.s32.totalorder %s218, %s221
      %p227 = scmp.eq.s32.totalorder %s31, 0
      %p228 = por %p226, %p227
      %p229 = scmp.ne.s32.totalorder %s218, %s221
      %p230 = scmp.eq.s32.totalorder %s36, 1
      %p231 = por %p229, %p230
      %p232 = scmp.ne.s32.totalorder %s221, %s222
      %p233 = scmp.eq.s32.totalorder %s36, 0
      %p234 = por %p232, %p233
      %p235 = scmp.ne.s32.totalorder %s221, %s222
      %p236 = scmp.eq.s32.totalorder %s37, 1
      %p237 = por %p235, %p236
      %p239 = scmp.ne.s32.totalorder %s222, %s238
      %p240 = scmp.eq.s32.totalorder %s37, 0
      %p241 = por %p239, %p240
      %s242 = ssub.s32 %s40, %s49
      %p243 = scmp.eq.s32.totalorder %s242, 0
      %s245 = sadd.s32 %s244, 1
      %s246 = scalar_select %p243, %s244, %s245
      %p249 = pneg %p243
      %p250 = scmp.eq.s32.totalorder %s31, 1
      %p251 = por %p249, %p250
      %p252 = scmp.ne.s32.totalorder %s244, %s247
      %p253 = scmp.eq.s32.totalorder %s31, 0
      %p254 = por %p252, %p253
      %p255 = scmp.ne.s32.totalorder %s244, %s247
      %p256 = scmp.eq.s32.totalorder %s36, 1
      %p257 = por %p255, %p256
      %p258 = scmp.ne.s32.totalorder %s247, %s248
      %p259 = scmp.eq.s32.totalorder %s36, 0
      %p260 = por %p258, %p259
      %p261 = scmp.ne.s32.totalorder %s247, %s248
      %p262 = scmp.eq.s32.totalorder %s37, 1
      %p263 = por %p261, %p262
      %p265 = scmp.ne.s32.totalorder %s248, %s264
      %p266 = scmp.eq.s32.totalorder %s37, 0
      %p267 = por %p265, %p266
      %s268 = ssub.s32 %s40, %s49
      %p269 = scmp.eq.s32.totalorder %s268, 0
      %s271 = sadd.s32 %s270, 1
      %s272 = scalar_select %p269, %s270, %s271
      %p275 = pneg %p269
      %p276 = scmp.eq.s32.totalorder %s31, 1
      %p277 = por %p275, %p276
      %p278 = scmp.ne.s32.totalorder %s270, %s273
      %p279 = scmp.eq.s32.totalorder %s31, 0
      %p280 = por %p278, %p279
      %p281 = scmp.ne.s32.totalorder %s270, %s273
      %p282 = scmp.eq.s32.totalorder %s36, 1
      %p283 = por %p281, %p282
      %p284 = scmp.ne.s32.totalorder %s273, %s274
      %p285 = scmp.eq.s32.totalorder %s36, 0
      %p286 = por %p284, %p285
      %p287 = scmp.ne.s32.totalorder %s273, %s274
      %p288 = scmp.eq.s32.totalorder %s37, 1
      %p289 = por %p287, %p288
      %p291 = scmp.ne.s32.totalorder %s274, %s290
      %p292 = scmp.eq.s32.totalorder %s37, 0
      %p293 = por %p291, %p292
      %s294 = ssub.s32 %s40, %s49
      %p295 = scmp.eq.s32.totalorder %s294, 0
      %s297 = sadd.s32 %s296, 1
      %s298 = scalar_select %p295, %s296, %s297
      %p301 = pneg %p295
      %p302 = scmp.eq.s32.totalorder %s31, 1
      %p303 = por %p301, %p302
      %p304 = scmp.ne.s32.totalorder %s296, %s299
      %p305 = scmp.eq.s32.totalorder %s31, 0
      %p306 = por %p304, %p305
      %p307 = scmp.ne.s32.totalorder %s296, %s299
      %p308 = scmp.eq.s32.totalorder %s36, 1
      %p309 = por %p307, %p308
      %p310 = scmp.ne.s32.totalorder %s299, %s300
      %p311 = scmp.eq.s32.totalorder %s36, 0
      %p312 = por %p310, %p311
      %p313 = scmp.ne.s32.totalorder %s299, %s300
      %p314 = scmp.eq.s32.totalorder %s37, 1
      %p315 = por %p313, %p314
      %p317 = scmp.ne.s32.totalorder %s300, %s316
      %p318 = scmp.eq.s32.totalorder %s37, 0
      %p319 = por %p317, %p318
      %s321 = sadd.s32 %s320, 1
      %p324 = scmp.eq.s32.totalorder %s31, 1
      %p325 = scmp.ne.s32.totalorder %s320, %s322
      %p326 = scmp.eq.s32.totalorder %s31, 0
      %p327 = por %p325, %p326
      %p328 = scmp.ne.s32.totalorder %s320, %s322
      %p329 = scmp.eq.s32.totalorder %s36, 1
      %p330 = por %p328, %p329
      %p331 = scmp.ne.s32.totalorder %s322, %s323
      %p332 = scmp.eq.s32.totalorder %s36, 0
      %p333 = por %p331, %p332
      %p334 = scmp.ne.s32.totalorder %s322, %s323
      %p335 = scmp.eq.s32.totalorder %s37, 1
      %p336 = por %p334, %p335
      %p338 = scmp.ne.s32.totalorder %s323, %s337
      %p339 = scmp.eq.s32.totalorder %s37, 0
      %p340 = por %p338, %p339
      %s342 = sadd.s32 %s341, 1
      %p345 = scmp.eq.s32.totalorder %s31, 1
      %p346 = scmp.ne.s32.totalorder %s341, %s343
      %p347 = scmp.eq.s32.totalorder %s31, 0
      %p348 = por %p346, %p347
      %p349 = scmp.ne.s32.totalorder %s341, %s343
      %p350 = scmp.eq.s32.totalorder %s36, 1
      %p351 = por %p349, %p350
      %p352 = scmp.ne.s32.totalorder %s343, %s344
      %p353 = scmp.eq.s32.totalorder %s36, 0
      %p354 = por %p352, %p353
      %p355 = scmp.ne.s32.totalorder %s343, %s344
      %p356 = scmp.eq.s32.totalorder %s37, 1
      %p357 = por %p355, %p356
      %p359 = scmp.ne.s32.totalorder %s344, %s358
      %p360 = scmp.eq.s32.totalorder %s37, 0
      %p361 = por %p359, %p360
      %s363 = sadd.s32 %s362, 1
      %p366 = scmp.eq.s32.totalorder %s31, 1
      %p367 = scmp.ne.s32.totalorder %s362, %s364
      %p368 = scmp.eq.s32.totalorder %s31, 0
      %p369 = por %p367, %p368
      %p370 = scmp.ne.s32.totalorder %s362, %s364
      %p371 = scmp.eq.s32.totalorder %s36, 1
      %p372 = por %p370, %p371
      %p373 = scmp.ne.s32.totalorder %s364, %s365
      %p374 = scmp.eq.s32.totalorder %s36, 0
      %p375 = por %p373, %p374
      %p376 = scmp.ne.s32.totalorder %s364, %s365
      %p377 = scmp.eq.s32.totalorder %s37, 1
      %p378 = por %p376, %p377
      %p380 = scmp.ne.s32.totalorder %s365, %s379
      %p381 = scmp.eq.s32.totalorder %s37, 0
      %p382 = por %p380, %p381
      %s383 = ssub.s32 %s38, %s57
      %s384 = ssub.s32 %s39, %s53
      %s385 = sor.u32 %s383, %s384
      %p386 = scmp.eq.s32.totalorder %s385, 0
      %s388 = sadd.s32 %s387, 1
      %s389 = scalar_select %p386, %s387, %s388
      %p392 = pneg %p386
      %p393 = scmp.eq.s32.totalorder %s31, 1
      %p394 = por %p392, %p393
      %p395 = scmp.ne.s32.totalorder %s387, %s390
      %p396 = scmp.eq.s32.totalorder %s31, 0
      %p397 = por %p395, %p396
      %p398 = scmp.ne.s32.totalorder %s387, %s390
      %p399 = scmp.eq.s32.totalorder %s36, 1
      %p400 = por %p398, %p399
      %p401 = scmp.ne.s32.totalorder %s390, %s391
      %p402 = scmp.eq.s32.totalorder %s36, 0
      %p403 = por %p401, %p402
      %p404 = scmp.ne.s32.totalorder %s390, %s391
      %p405 = scmp.eq.s32.totalorder %s37, 1
      %p406 = por %p404, %p405
      %p408 = scmp.ne.s32.totalorder %s391, %s407
      %p409 = scmp.eq.s32.totalorder %s37, 0
      %p410 = por %p408, %p409
      %p411 = scmp.le.s32.totalorder 1, %s31
      %p412 = scmp.lt.s32.totalorder %s31, 3
      %p413 = pnand %p411, %p412
      %p414 = pneg %p413
      // Predicated region
      $region9: #{tpu_custom_call.1} parent=5 // pred_check
        _
      $region10: #{tpu_custom_call.1} parent=5 // pred_check_branch
        %416 = sbr.rel (%p413) target = $region12
      $region11: #{tpu_custom_call.1} parent=5 // pred_region
        %s417 = ssub.s32 %s31, 1
        // Predicated region
        $region13: #{tpu_custom_call.1} parent=11 // pred_check
          %p418 = pneg %p156
        $region14: #{tpu_custom_call.1} parent=11 // pred_check_branch
          %420 = sbr.rel (%p418) target = $region16
        $region15: #{tpu_custom_call.1} parent=11 // pred_region
          %s422 = ssub.s32 256, 256
          %423 = vsyncadd [#allocation12], %s422
          %s424 = smul.addr %s43, 64
          %s425 = scalar_lea.hbm %s3, %s424
          %s426 = sshll.u32 [#allocation11], 4
          %s427 = int_to_ptr.vmem [resolvable:$true] %s426
          %432 = dma.hbm_to_vmem [thread:$0]  %s425, 256, %s427, [#allocation12], 64, 64, 4
        $region16: #{tpu_custom_call.1} parent=11 // pred_fallthru
          _
        // Predicated region
        $region17: #{tpu_custom_call.1} parent=11 // pred_check
          %p433 = pneg %p182
        $region18: #{tpu_custom_call.1} parent=11 // pred_check_branch
          %435 = sbr.rel (%p433) target = $region20
        $region19: #{tpu_custom_call.1} parent=11 // pred_region
          %s437 = ssub.s32 16, 16
          %438 = vsyncadd [#allocation12], %s437
          %s439 = smul.addr %s43, 16
          %s440 = scalar_lea.hbm %s4, %s439
          %s442 = sshll.u32 [#allocation13], 4
          %s443 = int_to_ptr.vmem [resolvable:$true] %s442
          %445 = dma.hbm_to_vmem [thread:$0]  %s440, 16, %s443, [#allocation12]
        $region20: #{tpu_custom_call.1} parent=11 // pred_fallthru
          _
        // Predicated region
        $region21: #{tpu_custom_call.1} parent=11 // pred_check
          %p446 = pneg %p208
        $region22: #{tpu_custom_call.1} parent=11 // pred_check_branch
          %448 = sbr.rel (%p446) target = $region24
        $region23: #{tpu_custom_call.1} parent=11 // pred_region
          %s450 = ssub.s32 256, 256
          %451 = vsyncadd [#allocation15], %s450
          %s452 = smul.addr %s43, 64
          %s453 = scalar_lea.hbm %s5, %s452
          %s454 = sshll.u32 [#allocation14], 4
          %s455 = int_to_ptr.vmem [resolvable:$true] %s454
          %460 = dma.hbm_to_vmem [thread:$0]  %s453, 256, %s455, [#allocation15], 64, 64, 4
        $region24: #{tpu_custom_call.1} parent=11 // pred_fallthru
          _
        // Predicated region
        $region25: #{tpu_custom_call.1} parent=11 // pred_check
          %p461 = pneg %p234
        $region26: #{tpu_custom_call.1} parent=11 // pred_check_branch
          %463 = sbr.rel (%p461) target = $region28
        $region27: #{tpu_custom_call.1} parent=11 // pred_region
          %s465 = ssub.s32 16, 16
          %466 = vsyncadd [#allocation15], %s465
          %s467 = smul.addr %s43, 16
          %s468 = scalar_lea.hbm %s6, %s467
          %s470 = sshll.u32 [#allocation16], 4
          %s471 = int_to_ptr.vmem [resolvable:$true] %s470
          %473 = dma.hbm_to_vmem [thread:$0]  %s468, 16, %s471, [#allocation15]
        $region28: #{tpu_custom_call.1} parent=11 // pred_fallthru
          _
        // Predicated region
        $region29: #{tpu_custom_call.1} parent=11 // pred_check
          %p474 = pneg %p260
        $region30: #{tpu_custom_call.1} parent=11 // pred_check_branch
          %476 = sbr.rel (%p474) target = $region32
        $region31: #{tpu_custom_call.1} parent=11 // pred_region
          %s478 = ssub.s32 256, 256
          %479 = vsyncadd [#allocation18], %s478
          %s480 = smul.addr %s43, 64
          %s481 = scalar_lea.hbm %s7, %s480
          %s482 = sshll.u32 [#allocation17], 4
          %s483 = int_to_ptr.vmem [resolvable:$true] %s482
          %488 = dma.hbm_to_vmem [thread:$0]  %s481, 256, %s483, [#allocation18], 64, 64, 4
        $region32: #{tpu_custom_call.1} parent=11 // pred_fallthru
          _
        // Predicated region
        $region33: #{tpu_custom_call.1} parent=11 // pred_check
          %p489 = pneg %p286
        $region34: #{tpu_custom_call.1} parent=11 // pred_check_branch
          %491 = sbr.rel (%p489) target = $region36
        $region35: #{tpu_custom_call.1} parent=11 // pred_region
          %s493 = ssub.s32 16, 16
          %494 = vsyncadd [#allocation18], %s493
          %s495 = smul.addr %s43, 16
          %s496 = scalar_lea.hbm %s8, %s495
          %s498 = sshll.u32 [#allocation19], 4
          %s499 = int_to_ptr.vmem [resolvable:$true] %s498
          %501 = dma.hbm_to_vmem [thread:$0]  %s496, 16, %s499, [#allocation18]
        $region36: #{tpu_custom_call.1} parent=11 // pred_fallthru
          _
        // Predicated region
        $region37: #{tpu_custom_call.1} parent=11 // pred_check
          %p502 = pneg %p312
        $region38: #{tpu_custom_call.1} parent=11 // pred_check_branch
          %504 = sbr.rel (%p502) target = $region40
        $region39: #{tpu_custom_call.1} parent=11 // pred_region
          %s505 = smul.u32 4, %s43
          %p506 = scmp.lt.s32.totalorder %s505, 3
          %s507 = scalar_select %p506, %s505, 3
          %s508 = smul.addr %s507, 4
          %s509 = scalar_lea.vmem %s9, %s508
          %s510 = smul.u32 4, %s43
        $region40: #{tpu_custom_call.1} parent=11 // pred_fallthru
          _
        // Predicated region
        $region41: #{tpu_custom_call.1} parent=11 // pred_check
          %p511 = pneg %p333
        $region42: #{tpu_custom_call.1} parent=11 // pred_check_branch
          %513 = sbr.rel (%p511) target = $region44
        $region43: #{tpu_custom_call.1} parent=11 // pred_region
          _
        $region44: #{tpu_custom_call.1} parent=11 // pred_fallthru
          _
        // Predicated region
        $region45: #{tpu_custom_call.1} parent=11 // pred_check
          %p514 = pneg %p354
        $region46: #{tpu_custom_call.1} parent=11 // pred_check_branch
          %516 = sbr.rel (%p514) target = $region48
        $region47: #{tpu_custom_call.1} parent=11 // pred_region
          _
        $region48: #{tpu_custom_call.1} parent=11 // pred_fallthru
          _
        // Predicated region
        $region49: #{tpu_custom_call.1} parent=11 // pred_check
          %p517 = pneg %p375
        $region50: #{tpu_custom_call.1} parent=11 // pred_check_branch
          %519 = sbr.rel (%p517) target = $region52
        $region51: #{tpu_custom_call.1} parent=11 // pred_region
          _
        $region52: #{tpu_custom_call.1} parent=11 // pred_fallthru
          _
      $region12: #{tpu_custom_call.1} parent=5 // pred_fallthru
        _
      %p520 = scmp.lt.s32.totalorder %s31, 2
      // Predicated region
      $region53: #{tpu_custom_call.1} parent=5 // pred_check
        %p521 = pneg %p520
      $region54: #{tpu_custom_call.1} parent=5 // pred_check_branch
        %523 = sbr.rel (%p521) target = $region56
      $region55: #{tpu_custom_call.1} parent=5 // pred_region
        // Predicated region
        $region57: #{tpu_custom_call.1} parent=55 // pred_check
          %p524 = pneg %p72
        $region58: #{tpu_custom_call.1} parent=55 // pred_check_branch
          %526 = sbr.rel (%p524) target = $region60
        $region59: #{tpu_custom_call.1} parent=55 // pred_region
          %s527 = sand.u32 %s62, 1
          %s528 = scalar_lea.sflag [#allocation6], %s527
          %s529 = sand.u32 %s62, 1
          %s530 = smul.addr %s529, 8
          %s531 = scalar_lea.vmem [#allocation5], %s530
          %s533 = ssub.s32 128, 128
          %534 = vsyncadd %s528, %s533
          %s535 = sadd.s32 %s39, %s38
          %s536 = smul.addr %s535, 128
          %s537 = scalar_lea.hbm %s0, %s536
          %s539 = sshll.u32 %s531, 4
          %s540 = int_to_ptr.vmem [resolvable:$true] %s539
          %542 = dma.hbm_to_vmem [thread:$0]  %s537, 128, %s540, %s528
        $region60: #{tpu_custom_call.1} parent=55 // pred_fallthru
          _
        // Predicated region
        $region61: #{tpu_custom_call.1} parent=55 // pred_check
          %p543 = pneg %p98
        $region62: #{tpu_custom_call.1} parent=55 // pred_check_branch
          %545 = sbr.rel (%p543) target = $region64
        $region63: #{tpu_custom_call.1} parent=55 // pred_region
          %s546 = sand.u32 %s31, 1
          %s547 = scalar_lea.sflag [#allocation9], %s546
          %s548 = sand.u32 %s88, 1
          %s549 = smul.addr %s548, 4
          %s550 = scalar_lea.vmem [#allocation8], %s549
          %s552 = ssub.s32 64, 64
          %553 = vsyncadd %s547, %s552
          %s554 = smul.addr %s38, 64
          %s555 = scalar_lea.hbm %s1, %s554
          %s557 = sshll.u32 %s550, 4
          %s558 = int_to_ptr.vmem [resolvable:$true] %s557
          %560 = dma.hbm_to_vmem [thread:$0]  %s555, 64, %s558, %s547
        $region64: #{tpu_custom_call.1} parent=55 // pred_fallthru
          _
        // Predicated region
        $region65: #{tpu_custom_call.1} parent=55 // pred_check
          %p561 = pneg %p124
        $region66: #{tpu_custom_call.1} parent=55 // pred_check_branch
          %563 = sbr.rel (%p561) target = $region68
        $region67: #{tpu_custom_call.1} parent=55 // pred_region
          %s564 = sand.u32 %s31, 1
          %s565 = scalar_lea.sflag [#allocation9], %s564
          %s566 = sand.u32 %s114, 1
          %s567 = scalar_lea.vmem [#allocation10], %s566
          %s569 = ssub.s32 16, 16
          %570 = vsyncadd %s565, %s569
          %s571 = smul.addr %s38, 16
          %s572 = scalar_lea.hbm %s2, %s571
          %s574 = sshll.u32 %s567, 4
          %s575 = int_to_ptr.vmem [resolvable:$true] %s574
          %577 = dma.hbm_to_vmem [thread:$0]  %s572, 16, %s575, %s565
        $region68: #{tpu_custom_call.1} parent=55 // pred_fallthru
          _
      $region56: #{tpu_custom_call.1} parent=5 // pred_fallthru
        _
      %p578 = scmp.le.s32.totalorder 1, %s31
      %p579 = scmp.lt.s32.totalorder %s31, 3
      %p580 = pnand %p578, %p579
      %p581 = pneg %p580
      // Predicated region
      $region69: #{tpu_custom_call.1} parent=5 // pred_check
        _
      $region70: #{tpu_custom_call.1} parent=5 // pred_check_branch
        %583 = sbr.rel (%p580) target = $region72
      $region71: #{tpu_custom_call.1} parent=5 // pred_region
        %s584 = ssub.s32 %s31, 1
        %s585 = sand.u32 %s65, 1
        %s586 = scalar_lea.sflag [#allocation6], %s585
        %s587 = sand.u32 %s65, 1
        %s588 = smul.addr %s587, 8
        %s589 = scalar_lea.vmem [#allocation5], %s588
        // Predicated region
        $region73: #{tpu_custom_call.1} parent=71 // pred_check
          %p590 = pneg %p78
        $region74: #{tpu_custom_call.1} parent=71 // pred_check_branch
          %592 = sbr.rel (%p590) target = $region76
        $region75: #{tpu_custom_call.1} parent=71 // pred_region
          %593 = dma.done %s586, 128
        $region76: #{tpu_custom_call.1} parent=71 // pred_fallthru
          _
        %s594 = sand.u32 %s36, 1
        %s595 = scalar_lea.sflag [#allocation9], %s594
        %s596 = sand.u32 %s91, 1
        %s597 = smul.addr %s596, 4
        %s598 = scalar_lea.vmem [#allocation8], %s597
        // Predicated region
        $region77: #{tpu_custom_call.1} parent=71 // pred_check
          %p599 = pneg %p104
        $region78: #{tpu_custom_call.1} parent=71 // pred_check_branch
          %601 = sbr.rel (%p599) target = $region80
        $region79: #{tpu_custom_call.1} parent=71 // pred_region
          %602 = dma.done %s595, 64
        $region80: #{tpu_custom_call.1} parent=71 // pred_fallthru
          _
        %s603 = sand.u32 %s36, 1
        %s604 = scalar_lea.sflag [#allocation9], %s603
        %s605 = sand.u32 %s117, 1
        %s606 = scalar_lea.vmem [#allocation10], %s605
        // Predicated region
        $region81: #{tpu_custom_call.1} parent=71 // pred_check
          %p607 = pneg %p130
        $region82: #{tpu_custom_call.1} parent=71 // pred_check_branch
          %609 = sbr.rel (%p607) target = $region84
        $region83: #{tpu_custom_call.1} parent=71 // pred_region
          %610 = dma.done %s604, 16
        $region84: #{tpu_custom_call.1} parent=71 // pred_fallthru
          _
        // Predicated region
        $region85: #{tpu_custom_call.1} parent=71 // pred_check
          %p611 = pneg %p156
        $region86: #{tpu_custom_call.1} parent=71 // pred_check_branch
          %613 = sbr.rel (%p611) target = $region88
        $region87: #{tpu_custom_call.1} parent=71 // pred_region
          %614 = dma.done [#allocation12], 256
        $region88: #{tpu_custom_call.1} parent=71 // pred_fallthru
          _
        // Predicated region
        $region89: #{tpu_custom_call.1} parent=71 // pred_check
          %p615 = pneg %p182
        $region90: #{tpu_custom_call.1} parent=71 // pred_check_branch
          %617 = sbr.rel (%p615) target = $region92
        $region91: #{tpu_custom_call.1} parent=71 // pred_region
          %618 = dma.done [#allocation12], 16
        $region92: #{tpu_custom_call.1} parent=71 // pred_fallthru
          _
        // Predicated region
        $region93: #{tpu_custom_call.1} parent=71 // pred_check
          %p619 = pneg %p208
        $region94: #{tpu_custom_call.1} parent=71 // pred_check_branch
          %621 = sbr.rel (%p619) target = $region96
        $region95: #{tpu_custom_call.1} parent=71 // pred_region
          %622 = dma.done [#allocation15], 256
        $region96: #{tpu_custom_call.1} parent=71 // pred_fallthru
          _
        // Predicated region
        $region97: #{tpu_custom_call.1} parent=71 // pred_check
          %p623 = pneg %p234
        $region98: #{tpu_custom_call.1} parent=71 // pred_check_branch
          %625 = sbr.rel (%p623) target = $region100
        $region99: #{tpu_custom_call.1} parent=71 // pred_region
          %626 = dma.done [#allocation15], 16
        $region100: #{tpu_custom_call.1} parent=71 // pred_fallthru
          _
        // Predicated region
        $region101: #{tpu_custom_call.1} parent=71 // pred_check
          %p627 = pneg %p260
        $region102: #{tpu_custom_call.1} parent=71 // pred_check_branch
          %629 = sbr.rel (%p627) target = $region104
        $region103: #{tpu_custom_call.1} parent=71 // pred_region
          %630 = dma.done [#allocation18], 256
        $region104: #{tpu_custom_call.1} parent=71 // pred_fallthru
          _
        // Predicated region
        $region105: #{tpu_custom_call.1} parent=71 // pred_check
          %p631 = pneg %p286
        $region106: #{tpu_custom_call.1} parent=71 // pred_check_branch
          %633 = sbr.rel (%p631) target = $region108
        $region107: #{tpu_custom_call.1} parent=71 // pred_region
          %634 = dma.done [#allocation18], 16
        $region108: #{tpu_custom_call.1} parent=71 // pred_fallthru
          _
        %s635 = sand.u32 %s65, 1
        %s636 = scalar_lea.sflag [#allocation6], %s635
        %s637 = sand.u32 %s65, 1
        %s638 = smul.addr %s637, 8
        %s639 = scalar_lea.vmem [#allocation5], %s638
        %p640 = pneg %p78
        %p641 = pneg %p75
        %s642 = sand.u32 %s36, 1
        %s643 = scalar_lea.sflag [#allocation9], %s642
        %s644 = sand.u32 %s91, 1
        %s645 = smul.addr %s644, 4
        %s646 = scalar_lea.vmem [#allocation8], %s645
        %p647 = pneg %p104
        %p648 = pneg %p101
        %s649 = sand.u32 %s36, 1
        %s650 = scalar_lea.sflag [#allocation9], %s649
        %s651 = sand.u32 %s117, 1
        %s652 = scalar_lea.vmem [#allocation10], %s651
        %p653 = pneg %p130
        %p654 = pneg %p127
        %p655 = pneg %p156
        %p656 = pneg %p153
        %p657 = pneg %p182
        %p658 = pneg %p179
        %p659 = pneg %p208
        %p660 = pneg %p205
        %p661 = pneg %p234
        %p662 = pneg %p231
        %p663 = pneg %p260
        %p664 = pneg %p257
        %p665 = pneg %p286
        %p666 = pneg %p283
        %s667 = smul.u32 4, %s43
        %p668 = scmp.lt.s32.totalorder %s667, 3
        %s669 = scalar_select %p668, %s667, 3
        %s670 = smul.addr %s669, 4
        %s671 = scalar_lea.vmem %s9, %s670
        %p672 = pneg %p312
        %p673 = pneg %p309
        %p674 = pneg %p333
        %p675 = pneg %p330
        %p676 = pneg %p354
        %p677 = pneg %p351
        %p678 = pneg %p375
        %p679 = pneg %p372
        %p680 = pneg %p403
        %p681 = pneg %p400
        %s682 = sand.u32 %s390, 1
        %s683 = scalar_lea.sflag [#allocation7], %s682
        %s684 = sand.u32 %s390, 1
        %s685 = smul.addr %s684, 8
        %s686 = scalar_lea.vmem [#allocation20], %s685
        %s687 = smul.u32 4, %s43
        %p688 = scmp.lt.s32.totalorder %s687, 3
        %s689 = scalar_select %p688, %s687, 3
        %s690 = smul.addr %s689, 4
        %s691 = scalar_lea.vmem %s9, %s690
        %s692 = smul.u32 4, %s43
        %v694 = vld [vmem:[%s589] sm:$0xff]
        %v695 = vpack.c.bf16 %v694, %v694
        %v696 = vld [vmem:[%s606] sm:$0x1]
        %p697 = scmp.eq.s32.totalorder %s43, 0
        // Predicated region
        $region109: #{tpu_custom_call.1} parent=71 // pred_check
          %p698 = pneg %p697
        $region110: #{tpu_custom_call.1} parent=71 // pred_check_branch
          %700 = sbr.rel (%p698) target = $region112
        $region111: #{tpu_custom_call.1} parent=71 // pred_region
          %vm701 = vcmask 261120
          %702 = vst.msk [vmem:[#allocation2] sm:$0xff] %vm701, 0.0
        $region112: #{tpu_custom_call.1} parent=71 // pred_fallthru
          _
        %p703 = scmp.eq.s32.totalorder %s42, 0
        // Predicated region
        $region113: #{tpu_custom_call.1} parent=71 // pred_check
          %p704 = pneg %p703
        $region114: #{tpu_custom_call.1} parent=71 // pred_check_branch
          %706 = sbr.rel (%p704) target = $region116
        $region115: #{tpu_custom_call.1} parent=71 // pred_region
          %v707 = vld [vmem:[%s598] sm:$0xf]
          %v708 = vld [vmem:[#allocation14] sm:$0xf]
          %v709 = vld [vmem:[#allocation14 + $0x4] sm:$0xf]
          %v710 = vld [vmem:[#allocation14 + $0x8] sm:$0xf]
          %v711 = vld [vmem:[#allocation14 + $0xc] sm:$0xf]
          %v712 = vld [vmem:[#allocation16] sm:$0x1]
          %v714 = vlaneseq
          %v715 = vshrl.u32 %v714, 7
          %v716 = vsub.s32 0, %v715
          %v717 = vrot.slane %v712, %v716
          %v723 = vunpack.c.l.b16 %v708
          %v724 = vunpack.c.l.b16 %v709
          %v725 = vunpack.c.l.b16 %v710
          %v726 = vunpack.c.l.b16 %v711
          %v727 = vpack.c.b16 %v724, %v723
          %v728 = vpack.c.b16 %v726, %v725
          %vm731 = vcmask 261120
          %v733 = vsel %vm731, %v707, 0
          %735 = vmatprep.subr.bf16.mxu0 0
          %736 = vmatpush1.bf16.msra.mxu0 0
          %737 = vmatprep.subr.bf16.mxu0 0
          %738 = vmatpush1.bf16.msra.mxu0 0
          %739 = vmatprep.subr.bf16.mxu0 0
          %740 = vmatpush1.bf16.msra.mxu0 0
          %741 = vmatprep.subr.bf16.mxu0 0
          %742 = vmatpush1.bf16.msra.mxu0 0
          %743 = vmatprep.subr.bf16.mxu0 0
          %744 = vmatpush1.bf16.msra.mxu0 0
          %745 = vmatprep.subr.bf16.mxu0 0
          %746 = vmatpush1.bf16.msra.mxu0 0
          %747 = vmatprep.subr.bf16.mxu0 0
          %748 = vmatpush1.bf16.msra.mxu0 %v728
          %749 = vmatprep.subr.bf16.mxu0 0
          %750 = vmatpush1.bf16.msra.mxu0 %v727
          %751 = vmatprep.subr.bf16.mxu0 0
          %752 = vmatpush2.bf16.msra.mxu0 0
          %753 = vmatprep.subr.bf16.mxu0 0
          %754 = vmatpush2.bf16.msra.mxu0 0
          %755 = vmatprep.subr.bf16.mxu0 0
          %756 = vmatpush2.bf16.msra.mxu0 0
          %757 = vmatprep.subr.bf16.mxu0 0
          %758 = vmatpush2.bf16.msra.mxu0 0
          %759 = vmatprep.subr.bf16.mxu0 0
          %760 = vmatpush2.bf16.msra.mxu0 0
          %761 = vmatprep.subr.bf16.mxu0 0
          %762 = vmatpush2.bf16.msra.mxu0 0
          %763 = vmatprep.subr.bf16.mxu0 0
          %764 = vmatpush2.bf16.msra.mxu0 0
          %765 = vmatprep.subr.bf16.mxu0 0
          %766 = vmatpush2.bf16.msra.mxu0 0
          %767 = vmatprep.mubr.bf16.mxu0 0
          %768 = vmatmul.mubr.bf16.gmra.mxu0 %v733
          %v769 = vpop.f32.mrf.mxu0
          %v770 = vadd.f32 %v717, %v769
          %v771 = vpop.f32.mrf.mxu0
          %v772 = vpop.f32.mrf.mxu0
          %v773 = vpop.f32.mrf.mxu0
          %774 = vdwg.mxu0
          %v775 = vld [vmem:[#allocation17] sm:$0xf]
          %v776 = vld [vmem:[#allocation17 + $0x4] sm:$0xf]
          %v777 = vld [vmem:[#allocation17 + $0x8] sm:$0xf]
          %v778 = vld [vmem:[#allocation17 + $0xc] sm:$0xf]
          %v779 = vld [vmem:[#allocation19] sm:$0x1]
          %v781 = vlaneseq
          %v782 = vshrl.u32 %v781, 7
          %v783 = vsub.s32 0, %v782
          %v784 = vrot.slane %v779, %v783
          %v790 = vunpack.c.l.b16 %v775
          %v791 = vunpack.c.l.b16 %v776
          %v792 = vunpack.c.l.b16 %v777
          %v793 = vunpack.c.l.b16 %v778
          %v794 = vpack.c.b16 %v791, %v790
          %v795 = vpack.c.b16 %v793, %v792
          %798 = vmatprep.subr.bf16.mxu0 0
          %799 = vmatpush1.bf16.msra.mxu0 0
          %800 = vmatprep.subr.bf16.mxu0 0
          %801 = vmatpush1.bf16.msra.mxu0 0
          %802 = vmatprep.subr.bf16.mxu0 0
          %803 = vmatpush1.bf16.msra.mxu0 0
          %804 = vmatprep.subr.bf16.mxu0 0
          %805 = vmatpush1.bf16.msra.mxu0 0
          %806 = vmatprep.subr.bf16.mxu0 0
          %807 = vmatpush1.bf16.msra.mxu0 0
          %808 = vmatprep.subr.bf16.mxu0 0
          %809 = vmatpush1.bf16.msra.mxu0 0
          %810 = vmatprep.subr.bf16.mxu0 0
          %811 = vmatpush1.bf16.msra.mxu0 %v795
          %812 = vmatprep.subr.bf16.mxu0 0
          %813 = vmatpush1.bf16.msra.mxu0 %v794
          %814 = vmatprep.subr.bf16.mxu0 0
          %815 = vmatpush2.bf16.msra.mxu0 0
          %816 = vmatprep.subr.bf16.mxu0 0
          %817 = vmatpush2.bf16.msra.mxu0 0
          %818 = vmatprep.subr.bf16.mxu0 0
          %819 = vmatpush2.bf16.msra.mxu0 0
          %820 = vmatprep.subr.bf16.mxu0 0
          %821 = vmatpush2.bf16.msra.mxu0 0
          %822 = vmatprep.subr.bf16.mxu0 0
          %823 = vmatpush2.bf16.msra.mxu0 0
          %824 = vmatprep.subr.bf16.mxu0 0
          %825 = vmatpush2.bf16.msra.mxu0 0
          %826 = vmatprep.subr.bf16.mxu0 0
          %827 = vmatpush2.bf16.msra.mxu0 0
          %828 = vmatprep.subr.bf16.mxu0 0
          %829 = vmatpush2.bf16.msra.mxu0 0
          %830 = vmatprep.mubr.bf16.mxu0 0
          %831 = vmatmul.mubr.bf16.gmra.mxu0 %v733
          %v832 = vpop.f32.mrf.mxu0
          %v833 = vadd.f32 %v784, %v832
          %v834 = vpop.f32.mrf.mxu0
          %v835 = vpop.f32.mrf.mxu0
          %v836 = vpop.f32.mrf.mxu0
          %837 = vdwg.mxu0
          %v838 = vpack.c.bf16 %v770, %v770
          %s839 = smul.addr %s43, 4
          %s840 = scalar_lea.vmem [#allocation3], %s839
          %vm841 = vcmask 257024
          %842 = vst.msk [vmem:[%s840] sm:$0xf] %vm841, %v838
          %v843 = vpack.c.bf16 %v833, %v833
          %s844 = smul.addr %s43, 4
          %s845 = scalar_lea.vmem [#allocation4], %s844
          %846 = vst.msk [vmem:[%s845] sm:$0xf] %vm841, %v843
        $region116: #{tpu_custom_call.1} parent=71 // pred_fallthru
          _
        %s847 = smul.addr %s43, 4
        %s848 = scalar_lea.vmem [#allocation3], %s847
        %v849 = vld [vmem:[%s848] sm:$0xf]
        %s850 = smul.addr %s43, 4
        %s851 = scalar_lea.vmem [#allocation4], %s850
        %v852 = vld [vmem:[%s851] sm:$0xf]
        %v853 = vld [vmem:[#allocation11] sm:$0xf]
        %v854 = vld [vmem:[#allocation11 + $0x4] sm:$0xf]
        %v855 = vld [vmem:[#allocation11 + $0x8] sm:$0xf]
        %v856 = vld [vmem:[#allocation11 + $0xc] sm:$0xf]
        %v857 = vld [vmem:[#allocation13] sm:$0x1]
        %v859 = vlaneseq
        %v860 = vshrl.u32 %v859, 7
        %v861 = vsub.s32 0, %v860
        %v862 = vrot.slane %v857, %v861
        %v868 = vunpack.c.l.b16 %v853
        %v869 = vunpack.c.l.b16 %v854
        %v870 = vunpack.c.l.b16 %v855
        %v871 = vunpack.c.l.b16 %v856
        %v872 = vpack.c.b16 %v869, %v868
        %v873 = vpack.c.b16 %v871, %v870
        %vm876 = vcmask 261120
        %v878 = vsel %vm876, %v695, 0
        %880 = vmatprep.subr.bf16.mxu0 0
        %881 = vmatpush1.bf16.msra.mxu0 0
        %882 = vmatprep.subr.bf16.mxu0 0
        %883 = vmatpush1.bf16.msra.mxu0 0
        %884 = vmatprep.subr.bf16.mxu0 0
        %885 = vmatpush1.bf16.msra.mxu0 0
        %886 = vmatprep.subr.bf16.mxu0 0
        %887 = vmatpush1.bf16.msra.mxu0 0
        %888 = vmatprep.subr.bf16.mxu0 0
        %889 = vmatpush1.bf16.msra.mxu0 0
        %890 = vmatprep.subr.bf16.mxu0 0
        %891 = vmatpush1.bf16.msra.mxu0 0
        %892 = vmatprep.subr.bf16.mxu0 0
        %893 = vmatpush1.bf16.msra.mxu0 %v873
        %894 = vmatprep.subr.bf16.mxu0 0
        %895 = vmatpush1.bf16.msra.mxu0 %v872
        %896 = vmatprep.subr.bf16.mxu0 0
        %897 = vmatpush2.bf16.msra.mxu0 0
        %898 = vmatprep.subr.bf16.mxu0 0
        %899 = vmatpush2.bf16.msra.mxu0 0
        %900 = vmatprep.subr.bf16.mxu0 0
        %901 = vmatpush2.bf16.msra.mxu0 0
        %902 = vmatprep.subr.bf16.mxu0 0
        %903 = vmatpush2.bf16.msra.mxu0 0
        %904 = vmatprep.subr.bf16.mxu0 0
        %905 = vmatpush2.bf16.msra.mxu0 0
        %906 = vmatprep.subr.bf16.mxu0 0
        %907 = vmatpush2.bf16.msra.mxu0 0
        %908 = vmatprep.subr.bf16.mxu0 0
        %909 = vmatpush2.bf16.msra.mxu0 0
        %910 = vmatprep.subr.bf16.mxu0 0
        %911 = vmatpush2.bf16.msra.mxu0 0
        %912 = vmatprep.mubr.bf16.mxu0 0
        %913 = vmatmul.mubr.bf16.gmra.mxu0 %v878
        %v914 = vpop.f32.mrf.mxu0
        %v915 = vadd.f32 %v862, %v914
        %v916 = vpop.f32.mrf.mxu0
        %v917 = vpop.f32.mrf.mxu0
        %v918 = vpop.f32.mrf.mxu0
        %919 = vdwg.mxu0
        %v920 = vmul.f32 %v915, 0.35355338
        %v921 = vpack.c.bf16 %v920, %v920
        %v923 = vlaneseq
        %v924 = vshrl.u32 %v923, 7
        %v925 = vsub.s32 0, %v924
        %v926 = vrot.slane %v696, %v925
        %vm928 = vcmask 64512
        %v930 = vsel %vm928, %v921, 0
        %v933 = vsel %vm928, %v849, 0
        %935 = vmatprep.subr.bf16.mxu0 0
        %936 = vmatpush1.bf16.xpose.msra.mxu0 0
        %937 = vmatprep.subr.bf16.mxu0 0
        %938 = vmatpush1.bf16.xpose.msra.mxu0 0
        %939 = vmatprep.subr.bf16.mxu0 0
        %940 = vmatpush1.bf16.xpose.msra.mxu0 0
        %941 = vmatprep.subr.bf16.mxu0 0
        %942 = vmatpush1.bf16.xpose.msra.mxu0 0
        %943 = vmatprep.subr.bf16.mxu0 0
        %944 = vmatpush1.bf16.xpose.msra.mxu0 0
        %945 = vmatprep.subr.bf16.mxu0 0
        %946 = vmatpush1.bf16.xpose.msra.mxu0 0
        %947 = vmatprep.subr.bf16.mxu0 0
        %948 = vmatpush1.bf16.xpose.msra.mxu0 0
        %949 = vmatprep.subr.bf16.mxu0 0
        %950 = vmatpush1.bf16.xpose.msra.mxu0 %v933
        %951 = vmatprep.subr.bf16.mxu0 0
        %952 = vmatpush2.bf16.xpose.msra.mxu0 0
        %953 = vmatprep.subr.bf16.mxu0 0
        %954 = vmatpush2.bf16.xpose.msra.mxu0 0
        %955 = vmatprep.subr.bf16.mxu0 0
        %956 = vmatpush2.bf16.xpose.msra.mxu0 0
        %957 = vmatprep.subr.bf16.mxu0 0
        %958 = vmatpush2.bf16.xpose.msra.mxu0 0
        %959 = vmatprep.subr.bf16.mxu0 0
        %960 = vmatpush2.bf16.xpose.msra.mxu0 0
        %961 = vmatprep.subr.bf16.mxu0 0
        %962 = vmatpush2.bf16.xpose.msra.mxu0 0
        %963 = vmatprep.subr.bf16.mxu0 0
        %964 = vmatpush2.bf16.xpose.msra.mxu0 0
        %965 = vmatprep.subr.bf16.mxu0 0
        %966 = vmatpush2.bf16.xpose.msra.mxu0 0
        %967 = vmatprep.mubr.bf16.mxu0 0
        %968 = vmatmul.mubr.bf16.gmra.mxu0 %v930
        %v969 = vpop.f32.mrf.mxu0
        %v970 = vadd.f32 %v926, %v969
        %v971 = vpop.f32.mrf.mxu0
        %v972 = vpop.f32.mrf.mxu0
        %v973 = vpop.f32.mrf.mxu0
        %974 = vdwg.mxu0
        %v975 = vsel %vm928, %v970, -inf
        %976 = vmax.xlane.f32.xlu0 %v975
        %v977 = vpop.xlane.xlu0 %976
        %v978 = vsub.f32 %v970, %v977
        %v979 = vmul.f32 %v978, 1.442695
        %v980 = vpow.pop %v979
        %v981 = vsel %vm928, %v980, 0.0
        %982 = vadd.xlane.f32.xlu0 %v981
        %v983 = vpop.xlane.xlu0 %982
        %v984 = vpack.c.bf16 %v980, %v980
        %v986 = vsel %vm928, %v984, 0
        %vm988 = vcmask 1043456
        %v990 = vsel %vm988, %v852, 0
        %992 = vmatprep.subr.bf16.mxu0 0
        %993 = vmatpush1.bf16.msra.mxu0 0
        %994 = vmatprep.subr.bf16.mxu0 0
        %995 = vmatpush1.bf16.msra.mxu0 0
        %996 = vmatprep.subr.bf16.mxu0 0
        %997 = vmatpush1.bf16.msra.mxu0 0
        %998 = vmatprep.subr.bf16.mxu0 0
        %999 = vmatpush1.bf16.msra.mxu0 0
        %1000 = vmatprep.subr.bf16.mxu0 0
        %1001 = vmatpush1.bf16.msra.mxu0 0
        %1002 = vmatprep.subr.bf16.mxu0 0
        %1003 = vmatpush1.bf16.msra.mxu0 0
        %1004 = vmatprep.subr.bf16.mxu0 0
        %1005 = vmatpush1.bf16.msra.mxu0 0
        %1006 = vmatprep.subr.bf16.mxu0 0
        %1007 = vmatpush1.bf16.msra.mxu0 %v990
        %1008 = vmatprep.subr.bf16.mxu0 0
        %1009 = vmatpush2.bf16.msra.mxu0 0
        %1010 = vmatprep.subr.bf16.mxu0 0
        %1011 = vmatpush2.bf16.msra.mxu0 0
        %1012 = vmatprep.subr.bf16.mxu0 0
        %1013 = vmatpush2.bf16.msra.mxu0 0
        %1014 = vmatprep.subr.bf16.mxu0 0
        %1015 = vmatpush2.bf16.msra.mxu0 0
        %1016 = vmatprep.subr.bf16.mxu0 0
        %1017 = vmatpush2.bf16.msra.mxu0 0
        %1018 = vmatprep.subr.bf16.mxu0 0
        %1019 = vmatpush2.bf16.msra.mxu0 0
        %1020 = vmatprep.subr.bf16.mxu0 0
        %1021 = vmatpush2.bf16.msra.mxu0 0
        %1022 = vmatprep.subr.bf16.mxu0 0
        %1023 = vmatpush2.bf16.msra.mxu0 0
        %1024 = vmatprep.mubr.bf16.mxu0 0
        %1025 = vmatmul.mubr.bf16.gmra.mxu0 %v986
        %v1026 = vpop.f32.mrf.mxu0
        %v1027 = vadd.f32 0.0, %v1026
        %v1028 = vpop.f32.mrf.mxu0
        %v1029 = vpop.f32.mrf.mxu0
        %v1030 = vpop.f32.mrf.mxu0
        %1031 = vdwg.mxu0
        %v1032 = vrcp.pop %v983
        %v1033 = vmul.f32 %v1027, %v1032
        %v1034 = vpack.c.bf16 %v1033, %v1033
        %1036 = vrot.lane.b32.xlu0 %v921, 120
        %v1037 = vpop.permute.xlu0 %1036
        %v1039 = vunpack.c.l.b16 %v849
        %v1040 = vpack.c.b16 %v1039, %v1039
        %1041 = vrot.lane.b32.xlu0 %v1040, 120
        %v1042 = vpop.permute.xlu0 %1041
        %v1044 = vsel %vm928, %v1037, 0
        %v1047 = vsel %vm928, %v1042, 0
        %1049 = vmatprep.subr.bf16.mxu0 0
        %1050 = vmatpush1.bf16.xpose.msra.mxu0 0
        %1051 = vmatprep.subr.bf16.mxu0 0
        %1052 = vmatpush1.bf16.xpose.msra.mxu0 0
        %1053 = vmatprep.subr.bf16.mxu0 0
        %1054 = vmatpush1.bf16.xpose.msra.mxu0 0
        %1055 = vmatprep.subr.bf16.mxu0 0
        %1056 = vmatpush1.bf16.xpose.msra.mxu0 0
        %1057 = vmatprep.subr.bf16.mxu0 0
        %1058 = vmatpush1.bf16.xpose.msra.mxu0 0
        %1059 = vmatprep.subr.bf16.mxu0 0
        %1060 = vmatpush1.bf16.xpose.msra.mxu0 0
        %1061 = vmatprep.subr.bf16.mxu0 0
        %1062 = vmatpush1.bf16.xpose.msra.mxu0 0
        %1063 = vmatprep.subr.bf16.mxu0 0
        %1064 = vmatpush1.bf16.xpose.msra.mxu0 %v1047
        %1065 = vmatprep.subr.bf16.mxu0 0
        %1066 = vmatpush2.bf16.xpose.msra.mxu0 0
        %1067 = vmatprep.subr.bf16.mxu0 0
        %1068 = vmatpush2.bf16.xpose.msra.mxu0 0
        %1069 = vmatprep.subr.bf16.mxu0 0
        %1070 = vmatpush2.bf16.xpose.msra.mxu0 0
        %1071 = vmatprep.subr.bf16.mxu0 0
        %1072 = vmatpush2.bf16.xpose.msra.mxu0 0
        %1073 = vmatprep.subr.bf16.mxu0 0
        %1074 = vmatpush2.bf16.xpose.msra.mxu0 0
        %1075 = vmatprep.subr.bf16.mxu0 0
        %1076 = vmatpush2.bf16.xpose.msra.mxu0 0
        %1077 = vmatprep.subr.bf16.mxu0 0
        %1078 = vmatpush2.bf16.xpose.msra.mxu0 0
        %1079 = vmatprep.subr.bf16.mxu0 0
        %1080 = vmatpush2.bf16.xpose.msra.mxu0 0
        %1081 = vmatprep.mubr.bf16.mxu0 0
        %1082 = vmatmul.mubr.bf16.gmra.mxu0 %v1044
        %v1083 = vpop.f32.mrf.mxu0
        %v1084 = vadd.f32 %v926, %v1083
        %v1085 = vpop.f32.mrf.mxu0
        %v1086 = vpop.f32.mrf.mxu0
        %v1087 = vpop.f32.mrf.mxu0
        %1088 = vdwg.mxu0
        %v1089 = vsel %vm928, %v1084, -inf
        %1090 = vmax.xlane.f32.xlu0 %v1089
        %v1091 = vpop.xlane.xlu0 %1090
        %v1092 = vsub.f32 %v1084, %v1091
        %v1093 = vmul.f32 %v1092, 1.442695
        %v1094 = vpow.pop %v1093
        %v1095 = vsel %vm928, %v1094, 0.0
        %1096 = vadd.xlane.f32.xlu0 %v1095
        %v1097 = vpop.xlane.xlu0 %1096
        %v1098 = vpack.c.bf16 %v1094, %v1094
        %v1100 = vunpack.c.l.b16 %v852
        %v1101 = vpack.c.b16 %v1100, %v1100
        %1102 = vrot.lane.b32.xlu0 %v1101, 120
        %v1103 = vpop.permute.xlu0 %1102
        %v1105 = vsel %vm928, %v1098, 0
        %v1108 = vsel %vm988, %v1103, 0
        %1110 = vmatprep.subr.bf16.mxu0 0
        %1111 = vmatpush1.bf16.msra.mxu0 0
        %1112 = vmatprep.subr.bf16.mxu0 0
        %1113 = vmatpush1.bf16.msra.mxu0 0
        %1114 = vmatprep.subr.bf16.mxu0 0
        %1115 = vmatpush1.bf16.msra.mxu0 0
        %1116 = vmatprep.subr.bf16.mxu0 0
        %1117 = vmatpush1.bf16.msra.mxu0 0
        %1118 = vmatprep.subr.bf16.mxu0 0
        %1119 = vmatpush1.bf16.msra.mxu0 0
        %1120 = vmatprep.subr.bf16.mxu0 0
        %1121 = vmatpush1.bf16.msra.mxu0 0
        %1122 = vmatprep.subr.bf16.mxu0 0
        %1123 = vmatpush1.bf16.msra.mxu0 0
        %1124 = vmatprep.subr.bf16.mxu0 0
        %1125 = vmatpush1.bf16.msra.mxu0 %v1108
        %1126 = vmatprep.subr.bf16.mxu0 0
        %1127 = vmatpush2.bf16.msra.mxu0 0
        %1128 = vmatprep.subr.bf16.mxu0 0
        %1129 = vmatpush2.bf16.msra.mxu0 0
        %1130 = vmatprep.subr.bf16.mxu0 0
        %1131 = vmatpush2.bf16.msra.mxu0 0
        %1132 = vmatprep.subr.bf16.mxu0 0
        %1133 = vmatpush2.bf16.msra.mxu0 0
        %1134 = vmatprep.subr.bf16.mxu0 0
        %1135 = vmatpush2.bf16.msra.mxu0 0
        %1136 = vmatprep.subr.bf16.mxu0 0
        %1137 = vmatpush2.bf16.msra.mxu0 0
        %1138 = vmatprep.subr.bf16.mxu0 0
        %1139 = vmatpush2.bf16.msra.mxu0 0
        %1140 = vmatprep.subr.bf16.mxu0 0
        %1141 = vmatpush2.bf16.msra.mxu0 0
        %1142 = vmatprep.mubr.bf16.mxu0 0
        %1143 = vmatmul.mubr.bf16.gmra.mxu0 %v1105
        %v1144 = vpop.f32.mrf.mxu0
        %v1145 = vadd.f32 0.0, %v1144
        %v1146 = vpop.f32.mrf.mxu0
        %v1147 = vpop.f32.mrf.mxu0
        %v1148 = vpop.f32.mrf.mxu0
        %1149 = vdwg.mxu0
        %v1150 = vrcp.pop %v1097
        %v1151 = vmul.f32 %v1145, %v1150
        %v1152 = vpack.c.bf16 %v1151, %v1151
        %1153 = vrot.lane.b32.xlu0 %v921, 112
        %v1154 = vpop.permute.xlu0 %1153
        %1155 = vrot.lane.b32.xlu0 %v1040, 112
        %v1156 = vpop.permute.xlu0 %1155
        %v1158 = vsel %vm928, %v1154, 0
        %v1161 = vsel %vm928, %v1156, 0
        %1163 = vmatprep.subr.bf16.mxu0 0
        %1164 = vmatpush1.bf16.xpose.msra.mxu0 0
        %1165 = vmatprep.subr.bf16.mxu0 0
        %1166 = vmatpush1.bf16.xpose.msra.mxu0 0
        %1167 = vmatprep.subr.bf16.mxu0 0
        %1168 = vmatpush1.bf16.xpose.msra.mxu0 0
        %1169 = vmatprep.subr.bf16.mxu0 0
        %1170 = vmatpush1.bf16.xpose.msra.mxu0 0
        %1171 = vmatprep.subr.bf16.mxu0 0
        %1172 = vmatpush1.bf16.xpose.msra.mxu0 0
        %1173 = vmatprep.subr.bf16.mxu0 0
        %1174 = vmatpush1.bf16.xpose.msra.mxu0 0
        %1175 = vmatprep.subr.bf16.mxu0 0
        %1176 = vmatpush1.bf16.xpose.msra.mxu0 0
        %1177 = vmatprep.subr.bf16.mxu0 0
        %1178 = vmatpush1.bf16.xpose.msra.mxu0 %v1161
        %1179 = vmatprep.subr.bf16.mxu0 0
        %1180 = vmatpush2.bf16.xpose.msra.mxu0 0
        %1181 = vmatprep.subr.bf16.mxu0 0
        %1182 = vmatpush2.bf16.xpose.msra.mxu0 0
        %1183 = vmatprep.subr.bf16.mxu0 0
        %1184 = vmatpush2.bf16.xpose.msra.mxu0 0
        %1185 = vmatprep.subr.bf16.mxu0 0
        %1186 = vmatpush2.bf16.xpose.msra.mxu0 0
        %1187 = vmatprep.subr.bf16.mxu0 0
        %1188 = vmatpush2.bf16.xpose.msra.mxu0 0
        %1189 = vmatprep.subr.bf16.mxu0 0
        %1190 = vmatpush2.bf16.xpose.msra.mxu0 0
        %1191 = vmatprep.subr.bf16.mxu0 0
        %1192 = vmatpush2.bf16.xpose.msra.mxu0 0
        %1193 = vmatprep.subr.bf16.mxu0 0
        %1194 = vmatpush2.bf16.xpose.msra.mxu0 0
        %1195 = vmatprep.mubr.bf16.mxu0 0
        %1196 = vmatmul.mubr.bf16.gmra.mxu0 %v1158
        %v1197 = vpop.f32.mrf.mxu0
        %v1198 = vadd.f32 %v926, %v1197
        %v1199 = vpop.f32.mrf.mxu0
        %v1200 = vpop.f32.mrf.mxu0
        %v1201 = vpop.f32.mrf.mxu0
        %1202 = vdwg.mxu0
        %v1203 = vsel %vm928, %v1198, -inf
        %1204 = vmax.xlane.f32.xlu0 %v1203
        %v1205 = vpop.xlane.xlu0 %1204
        %v1206 = vsub.f32 %v1198, %v1205
        %v1207 = vmul.f32 %v1206, 1.442695
        %v1208 = vpow.pop %v1207
        %v1209 = vsel %vm928, %v1208, 0.0
        %1210 = vadd.xlane.f32.xlu0 %v1209
        %v1211 = vpop.xlane.xlu0 %1210
        %v1212 = vpack.c.bf16 %v1208, %v1208
        %1213 = vrot.lane.b32.xlu0 %v1101, 112
        %v1214 = vpop.permute.xlu0 %1213
        %v1216 = vsel %vm928, %v1212, 0
        %v1219 = vsel %vm988, %v1214, 0
        %1221 = vmatprep.subr.bf16.mxu0 0
        %1222 = vmatpush1.bf16.msra.mxu0 0
        %1223 = vmatprep.subr.bf16.mxu0 0
        %1224 = vmatpush1.bf16.msra.mxu0 0
        %1225 = vmatprep.subr.bf16.mxu0 0
        %1226 = vmatpush1.bf16.msra.mxu0 0
        %1227 = vmatprep.subr.bf16.mxu0 0
        %1228 = vmatpush1.bf16.msra.mxu0 0
        %1229 = vmatprep.subr.bf16.mxu0 0
        %1230 = vmatpush1.bf16.msra.mxu0 0
        %1231 = vmatprep.subr.bf16.mxu0 0
        %1232 = vmatpush1.bf16.msra.mxu0 0
        %1233 = vmatprep.subr.bf16.mxu0 0
        %1234 = vmatpush1.bf16.msra.mxu0 0
        %1235 = vmatprep.subr.bf16.mxu0 0
        %1236 = vmatpush1.bf16.msra.mxu0 %v1219
        %1237 = vmatprep.subr.bf16.mxu0 0
        %1238 = vmatpush2.bf16.msra.mxu0 0
        %1239 = vmatprep.subr.bf16.mxu0 0
        %1240 = vmatpush2.bf16.msra.mxu0 0
        %1241 = vmatprep.subr.bf16.mxu0 0
        %1242 = vmatpush2.bf16.msra.mxu0 0
        %1243 = vmatprep.subr.bf16.mxu0 0
        %1244 = vmatpush2.bf16.msra.mxu0 0
        %1245 = vmatprep.subr.bf16.mxu0 0
        %1246 = vmatpush2.bf16.msra.mxu0 0
        %1247 = vmatprep.subr.bf16.mxu0 0
        %1248 = vmatpush2.bf16.msra.mxu0 0
        %1249 = vmatprep.subr.bf16.mxu0 0
        %1250 = vmatpush2.bf16.msra.mxu0 0
        %1251 = vmatprep.subr.bf16.mxu0 0
        %1252 = vmatpush2.bf16.msra.mxu0 0
        %1253 = vmatprep.mubr.bf16.mxu0 0
        %1254 = vmatmul.mubr.bf16.gmra.mxu0 %v1216
        %v1255 = vpop.f32.mrf.mxu0
        %v1256 = vadd.f32 0.0, %v1255
        %v1257 = vpop.f32.mrf.mxu0
        %v1258 = vpop.f32.mrf.mxu0
        %v1259 = vpop.f32.mrf.mxu0
        %1260 = vdwg.mxu0
        %v1261 = vrcp.pop %v1211
        %v1262 = vmul.f32 %v1256, %v1261
        %v1263 = vpack.c.bf16 %v1262, %v1262
        %1264 = vrot.lane.b32.xlu0 %v921, 104
        %v1265 = vpop.permute.xlu0 %1264
        %1266 = vrot.lane.b32.xlu0 %v1040, 104
        %v1267 = vpop.permute.xlu0 %1266
        %v1269 = vsel %vm928, %v1265, 0
        %v1272 = vsel %vm928, %v1267, 0
        %1274 = vmatprep.subr.bf16.mxu0 0
        %1275 = vmatpush1.bf16.xpose.msra.mxu0 0
        %1276 = vmatprep.subr.bf16.mxu0 0
        %1277 = vmatpush1.bf16.xpose.msra.mxu0 0
        %1278 = vmatprep.subr.bf16.mxu0 0
        %1279 = vmatpush1.bf16.xpose.msra.mxu0 0
        %1280 = vmatprep.subr.bf16.mxu0 0
        %1281 = vmatpush1.bf16.xpose.msra.mxu0 0
        %1282 = vmatprep.subr.bf16.mxu0 0
        %1283 = vmatpush1.bf16.xpose.msra.mxu0 0
        %1284 = vmatprep.subr.bf16.mxu0 0
        %1285 = vmatpush1.bf16.xpose.msra.mxu0 0
        %1286 = vmatprep.subr.bf16.mxu0 0
        %1287 = vmatpush1.bf16.xpose.msra.mxu0 0
        %1288 = vmatprep.subr.bf16.mxu0 0
        %1289 = vmatpush1.bf16.xpose.msra.mxu0 %v1272
        %1290 = vmatprep.subr.bf16.mxu0 0
        %1291 = vmatpush2.bf16.xpose.msra.mxu0 0
        %1292 = vmatprep.subr.bf16.mxu0 0
        %1293 = vmatpush2.bf16.xpose.msra.mxu0 0
        %1294 = vmatprep.subr.bf16.mxu0 0
        %1295 = vmatpush2.bf16.xpose.msra.mxu0 0
        %1296 = vmatprep.subr.bf16.mxu0 0
        %1297 = vmatpush2.bf16.xpose.msra.mxu0 0
        %1298 = vmatprep.subr.bf16.mxu0 0
        %1299 = vmatpush2.bf16.xpose.msra.mxu0 0
        %1300 = vmatprep.subr.bf16.mxu0 0
        %1301 = vmatpush2.bf16.xpose.msra.mxu0 0
        %1302 = vmatprep.subr.bf16.mxu0 0
        %1303 = vmatpush2.bf16.xpose.msra.mxu0 0
        %1304 = vmatprep.subr.bf16.mxu0 0
        %1305 = vmatpush2.bf16.xpose.msra.mxu0 0
        %1306 = vmatprep.mubr.bf16.mxu0 0
        %1307 = vmatmul.mubr.bf16.gmra.mxu0 %v1269
        %v1308 = vpop.f32.mrf.mxu0
        %v1309 = vadd.f32 %v926, %v1308
        %v1310 = vpop.f32.mrf.mxu0
        %v1311 = vpop.f32.mrf.mxu0
        %v1312 = vpop.f32.mrf.mxu0
        %1313 = vdwg.mxu0
        %v1314 = vsel %vm928, %v1309, -inf
        %1315 = vmax.xlane.f32.xlu0 %v1314
        %v1316 = vpop.xlane.xlu0 %1315
        %v1317 = vsub.f32 %v1309, %v1316
        %v1318 = vmul.f32 %v1317, 1.442695
        %v1319 = vpow.pop %v1318
        %v1320 = vsel %vm928, %v1319, 0.0
        %1321 = vadd.xlane.f32.xlu0 %v1320
        %v1322 = vpop.xlane.xlu0 %1321
        %v1323 = vpack.c.bf16 %v1319, %v1319
        %1324 = vrot.lane.b32.xlu0 %v1101, 104
        %v1325 = vpop.permute.xlu0 %1324
        %v1327 = vsel %vm928, %v1323, 0
        %v1330 = vsel %vm988, %v1325, 0
        %1332 = vmatprep.subr.bf16.mxu0 0
        %1333 = vmatpush1.bf16.msra.mxu0 0
        %1334 = vmatprep.subr.bf16.mxu0 0
        %1335 = vmatpush1.bf16.msra.mxu0 0
        %1336 = vmatprep.subr.bf16.mxu0 0
        %1337 = vmatpush1.bf16.msra.mxu0 0
        %1338 = vmatprep.subr.bf16.mxu0 0
        %1339 = vmatpush1.bf16.msra.mxu0 0
        %1340 = vmatprep.subr.bf16.mxu0 0
        %1341 = vmatpush1.bf16.msra.mxu0 0
        %1342 = vmatprep.subr.bf16.mxu0 0
        %1343 = vmatpush1.bf16.msra.mxu0 0
        %1344 = vmatprep.subr.bf16.mxu0 0
        %1345 = vmatpush1.bf16.msra.mxu0 0
        %1346 = vmatprep.subr.bf16.mxu0 0
        %1347 = vmatpush1.bf16.msra.mxu0 %v1330
        %1348 = vmatprep.subr.bf16.mxu0 0
        %1349 = vmatpush2.bf16.msra.mxu0 0
        %1350 = vmatprep.subr.bf16.mxu0 0
        %1351 = vmatpush2.bf16.msra.mxu0 0
        %1352 = vmatprep.subr.bf16.mxu0 0
        %1353 = vmatpush2.bf16.msra.mxu0 0
        %1354 = vmatprep.subr.bf16.mxu0 0
        %1355 = vmatpush2.bf16.msra.mxu0 0
        %1356 = vmatprep.subr.bf16.mxu0 0
        %1357 = vmatpush2.bf16.msra.mxu0 0
        %1358 = vmatprep.subr.bf16.mxu0 0
        %1359 = vmatpush2.bf16.msra.mxu0 0
        %1360 = vmatprep.subr.bf16.mxu0 0
        %1361 = vmatpush2.bf16.msra.mxu0 0
        %1362 = vmatprep.subr.bf16.mxu0 0
        %1363 = vmatpush2.bf16.msra.mxu0 0
        %1364 = vmatprep.mubr.bf16.mxu0 0
        %1365 = vmatmul.mubr.bf16.gmra.mxu0 %v1327
        %v1366 = vpop.f32.mrf.mxu0
        %v1367 = vadd.f32 0.0, %v1366
        %v1368 = vpop.f32.mrf.mxu0
        %v1369 = vpop.f32.mrf.mxu0
        %v1370 = vpop.f32.mrf.mxu0
        %1371 = vdwg.mxu0
        %v1372 = vrcp.pop %v1322
        %v1373 = vmul.f32 %v1367, %v1372
        %v1374 = vpack.c.bf16 %v1373, %v1373
        %1376 = vrot.lane.b32.xlu0 %v1152, 8
        %v1377 = vpop.permute.xlu0 %1376
        %1379 = vrot.lane.b32.xlu0 %v1263, 16
        %v1380 = vpop.permute.xlu0 %1379
        %1382 = vrot.lane.b32.xlu0 %v1374, 24
        %v1383 = vpop.permute.xlu0 %1382
        %v1386 = vsel %vm928, %v1034, %v1377
        %vm1387 = vcmask 130048
        %v1389 = vsel %vm1387, %v1386, %v1380
        %vm1390 = vcmask 195584
        %v1392 = vsel %vm1390, %v1389, %v1383
        %v1393 = vld [vmem:[#allocation2] sm:$0xff]
        %v1394 = vld [vmem:[%s691] sm:$0xf]
        %v1395 = vld [vmem:[%s691 + $0x4] sm:$0xf]
        %v1396 = vld [vmem:[%s691 + $0x8] sm:$0xf]
        %v1397 = vld [vmem:[%s691 + $0xc] sm:$0xf]
        %v1402 = vunpack.c.l.b16 %v1394
        %v1403 = vunpack.c.l.b16 %v1395
        %v1404 = vunpack.c.l.b16 %v1396
        %v1405 = vunpack.c.l.b16 %v1397
        %v1406 = vpack.c.b16 %v1403, %v1402
        %v1407 = vpack.c.b16 %v1405, %v1404
        %v1410 = vsel %vm876, %v1392, 0
        %1412 = vmatprep.subr.bf16.mxu0 0
        %1413 = vmatpush1.bf16.msra.mxu0 0
        %1414 = vmatprep.subr.bf16.mxu0 0
        %1415 = vmatpush1.bf16.msra.mxu0 0
        %1416 = vmatprep.subr.bf16.mxu0 0
        %1417 = vmatpush1.bf16.msra.mxu0 0
        %1418 = vmatprep.subr.bf16.mxu0 0
        %1419 = vmatpush1.bf16.msra.mxu0 0
        %1420 = vmatprep.subr.bf16.mxu0 0
        %1421 = vmatpush1.bf16.msra.mxu0 0
        %1422 = vmatprep.subr.bf16.mxu0 0
        %1423 = vmatpush1.bf16.msra.mxu0 0
        %1424 = vmatprep.subr.bf16.mxu0 0
        %1425 = vmatpush1.bf16.msra.mxu0 %v1407
        %1426 = vmatprep.subr.bf16.mxu0 0
        %1427 = vmatpush1.bf16.msra.mxu0 %v1406
        %1428 = vmatprep.subr.bf16.mxu0 0
        %1429 = vmatpush2.bf16.msra.mxu0 0
        %1430 = vmatprep.subr.bf16.mxu0 0
        %1431 = vmatpush2.bf16.msra.mxu0 0
        %1432 = vmatprep.subr.bf16.mxu0 0
        %1433 = vmatpush2.bf16.msra.mxu0 0
        %1434 = vmatprep.subr.bf16.mxu0 0
        %1435 = vmatpush2.bf16.msra.mxu0 0
        %1436 = vmatprep.subr.bf16.mxu0 0
        %1437 = vmatpush2.bf16.msra.mxu0 0
        %1438 = vmatprep.subr.bf16.mxu0 0
        %1439 = vmatpush2.bf16.msra.mxu0 0
        %1440 = vmatprep.subr.bf16.mxu0 0
        %1441 = vmatpush2.bf16.msra.mxu0 0
        %1442 = vmatprep.subr.bf16.mxu0 0
        %1443 = vmatpush2.bf16.msra.mxu0 0
        %1444 = vmatprep.mubr.bf16.mxu0 0
        %1445 = vmatmul.mubr.bf16.gmra.mxu0 %v1410
        %v1446 = vpop.f32.mrf.mxu0
        %v1447 = vadd.f32 0.0, %v1446
        %v1448 = vpop.f32.mrf.mxu0
        %v1449 = vpop.f32.mrf.mxu0
        %v1450 = vpop.f32.mrf.mxu0
        %1451 = vdwg.mxu0
        %v1452 = vadd.f32 %v1393, %v1447
        %1453 = vst.msk [vmem:[#allocation2] sm:$0xff] %vm876, %v1452
        // Predicated region
        $region117: #{tpu_custom_call.1} parent=71 // pred_check
          %p1454 = pneg %p697
        $region118: #{tpu_custom_call.1} parent=71 // pred_check_branch
          %1456 = sbr.rel (%p1454) target = $region120
        $region119: #{tpu_custom_call.1} parent=71 // pred_region
          %v1457 = vld [vmem:[#allocation2] sm:$0xff]
          %v1458 = vadd.f32 %v694, %v1457
          %v1459 = vld [vmem:[%s10] sm:$0x1]
          %v1461 = vlaneseq
          %v1462 = vshrl.u32 %v1461, 7
          %v1463 = vsub.s32 0, %v1462
          %v1464 = vrot.slane %v1459, %v1463
          %v1466 = vadd.f32 %v1458, %v1464
          %v1467 = vld [vmem:[%s11] sm:$0x1]
          %v1468 = vld [vmem:[%s12] sm:$0x1]
          %v1469 = vsel %vm876, %v1466, 0.0
          %1470 = vadd.xlane.f32.xlu0 %v1469
          %v1471 = vpop.xlane.xlu0 %1470
          %v1472 = vrcp.pop 32.0
          %v1473 = vmul.f32 %v1471, %v1472
          %v1474 = vsub.f32 %v1466, %v1473
          %v1475 = vmul.f32 %v1474, %v1474
          %v1476 = vsel %vm876, %v1475, 0.0
          %1477 = vadd.xlane.f32.xlu0 %v1476
          %v1478 = vpop.xlane.xlu0 %1477
          %v1479 = vmul.f32 %v1478, %v1472
          %v1480 = vadd.f32 %v1479, 1e-05
          %v1481 = vrsqrt.pop %v1480
          %v1482 = vmul.f32 %v1474, %v1481
          %v1484 = vlaneseq
          %v1485 = vshrl.u32 %v1484, 7
          %v1486 = vsub.s32 0, %v1485
          %v1487 = vrot.slane %v1467, %v1486
          %v1489 = vmul.f32 %v1482, %v1487
          %v1491 = vlaneseq
          %v1492 = vshrl.u32 %v1491, 7
          %v1493 = vsub.s32 0, %v1492
          %v1494 = vrot.slane %v1468, %v1493
          %v1496 = vadd.f32 %v1489, %v1494
          %1497 = vst.msk [vmem:[%s686] sm:$0xff] %vm876, %v1496
        $region120: #{tpu_custom_call.1} parent=71 // pred_fallthru
          _
        %s1498 = sand.u32 %s390, 1
        %s1499 = scalar_lea.sflag [#allocation7], %s1498
        %s1500 = sand.u32 %s390, 1
        %s1501 = smul.addr %s1500, 8
        %s1502 = scalar_lea.vmem [#allocation20], %s1501
        // Predicated region
        $region121: #{tpu_custom_call.1} parent=71 // pred_check
          %p1503 = pneg %p400
        $region122: #{tpu_custom_call.1} parent=71 // pred_check_branch
          %1505 = sbr.rel (%p1503) target = $region124
        $region123: #{tpu_custom_call.1} parent=71 // pred_region
          %s1507 = ssub.s32 128, 128
          %1508 = vsyncadd %s1499, %s1507
          %s1509 = sadd.s32 %s42, %s41
          %s1510 = smul.addr %s1509, 128
          %s1511 = scalar_lea.hbm %s13, %s1510
          %s1513 = sshll.u32 %s1502, 4
          %s1514 = int_to_ptr.vmem [resolvable:$true] %s1513
          %1516 = dma.vmem_to_hbm [thread:$0]  %s1514, 128, %s1511, %s1499
        $region124: #{tpu_custom_call.1} parent=71 // pred_fallthru
          _
      $region72: #{tpu_custom_call.1} parent=5 // pred_fallthru
        _
      %p1517 = scmp.le.s32.totalorder 2, %s31
      // Predicated region
      $region125: #{tpu_custom_call.1} parent=5 // pred_check
        %p1518 = pneg %p1517
      $region126: #{tpu_custom_call.1} parent=5 // pred_check_branch
        %1520 = sbr.rel (%p1518) target = $region128
      $region127: #{tpu_custom_call.1} parent=5 // pred_region
        %s1521 = ssub.s32 %s31, 2
        // Predicated region
        $region129: #{tpu_custom_call.1} parent=127 // pred_check
          %p1522 = pneg %p406
        $region130: #{tpu_custom_call.1} parent=127 // pred_check_branch
          %1524 = sbr.rel (%p1522) target = $region132
        $region131: #{tpu_custom_call.1} parent=127 // pred_region
          %s1525 = sand.u32 %s391, 1
          %s1526 = scalar_lea.sflag [#allocation7], %s1525
          %s1527 = sand.u32 %s391, 1
          %s1528 = smul.addr %s1527, 8
          %s1529 = scalar_lea.vmem [#allocation20], %s1528
          %1530 = dma.done %s1526, 128
        $region132: #{tpu_custom_call.1} parent=127 // pred_fallthru
          _
      $region128: #{tpu_custom_call.1} parent=5 // pred_fallthru
        _
    $region6: #{tpu_custom_call.1} parent=1 // loop_footer
      %s35 = sadd.s32 1, %s31
    $region7: #{tpu_custom_call.1} parent=1 // loop_footer_branch
      %30 = sbr.rel target = $region3
    $region8: #{tpu_custom_call.1} parent=1 // loop_exit
      _
    %1531 = vsyncpa [#allocation6], 1
    %s1532 = scalar_lea.sflag [#allocation6], 1
    %1533 = vsyncpa %s1532, 1
    %1534 = vsyncpa [#allocation9], 1
    %s1535 = scalar_lea.sflag [#allocation9], 1
    %1536 = vsyncpa %s1535, 1
    %1537 = vsyncpa [#allocation12], 1
    %1538 = vsyncpa [#allocation15], 1
    %1539 = vsyncpa [#allocation18], 1
    %1540 = vsyncpa [#allocation7], 1
    %s1541 = scalar_lea.sflag [#allocation7], 1
    %1542 = vsyncpa %s1541, 1

</llo_original>
